<compile_context>
chip_gen: v7x
topology: tpu7x:2x2x1
jax: 0.10.0
libtpu: 0.0.40
codegen_flags: <defaults>
</compile_context>

<pallas_src>
import functools
import math

import jax
import jax.numpy as jnp
from jax import lax
from jax.experimental import pallas as pl
from jax.experimental.pallas import tpu as pltpu


def _round_up(x, m):
    return ((x + m - 1) // m) * m


def _vmem_budget():
    """Per-generation VMEM sizing -> (tile_budget_bytes, vmem_limit_bytes)."""
    cap = 64 * 1024 * 1024                       # conservative default (v7x size)
    try:
        cap = int(getattr(pltpu.get_tpu_info(), "vmem_capacity_bytes", cap))
    except Exception:
        pass
    # v7x (64 MiB physical):   limit ~48 MiB, tile budget ~32 MiB
    # v5e/v6e (128 MiB):       limit ~96 MiB, tile budget ~64 MiB
    vmem_limit = min(int(cap * 0.75), 100 * 1024 * 1024)
    tile_budget = int(cap * 0.50)
    return tile_budget, vmem_limit


def _plan_tiles(B, S, D, in_bytes, out_bytes, budget_bytes, kv_buffers):
    """Choose (sq_pad, sk_pad, tq, bt) whose REAL working set fits the budget."""
    sk_pad = _round_up(S, 128)                   # key axis: lane-dense stores
    min_item = max(min(in_bytes, out_bytes), 1)
    q_align = 8 * max(1, 4 // min_item)          # sublane alignment: 8 / 16 / 32

    # Candidate (sq_pad, tq): least padded query work first, then bigger tiles.
    candidates = []
    sq_small = _round_up(S, q_align)
    if sq_small % 128 != 0:
        candidates.append((sq_small, sq_small))  # whole (small) query axis per step
    sq_big = _round_up(S, 128)
    for tq in (512, 256, 128):                   # 512 reaches ~85% HBM roofline (v6e)
        if sq_big % tq == 0:
            candidates.append((sq_big, tq))

    def vmem_est(bt, tq):
        q_tile = 2 * bt * tq * D * in_bytes                 # double-buffered
        kv_slab = kv_buffers * bt * sk_pad * D * in_bytes   # 1 buf (Buffered(1))
        out_blk = 2 * bt * tq * sk_pad * out_bytes          # double-buffered
        interm = 2 * bt * tq * sk_pad * 4                   # f32 `s` and `p`
        return q_tile + kv_slab + out_blk + interm

    def divisors_desc(n, cap):
        return [d for d in range(min(n, cap), 0, -1) if n % d == 0]

    for sq_pad, tq in candidates:
        for bt in divisors_desc(B, 64):          # fold many batches per step
            if vmem_est(bt, tq) <= budget_bytes:
                return sq_pad, sk_pad, tq, bt

    # TODO(synk): key-axis tiling with online-softmax accumulation for very
    # large S*D; for now fail loudly instead of emitting a VMEM-OOM config.
    raise ValueError(
        f"AttentionBias kernel: no (bt, tq) tiling fits the VMEM budget "
        f"({budget_bytes} bytes) for S={S}, D={D}.")


def _attention_bias_kernel(q_ref, kv_ref, out_ref, *, s_valid, scale, compute_dtype):
    # q_ref:  (BT, TQ, D)       query rows of node_enc for this tile
    # kv_ref: (BT, SK_PAD, D)   all (padded) rows of node_enc for this batch block
    # out_ref:(BT, TQ, SK_PAD)  softmax(q @ kv^T * scale) over the key axis
    q = q_ref[...]
    k = kv_ref[...]
    dims = (((2,), (2,)), ((0,), (0,)))          # contract D, batch over BT
    if compute_dtype is None:
        # Exact f32 path: force true-f32 MXU passes (default precision would
        # silently lower f32 dots to bf16 passes).
        s = lax.dot_general(q, k, dimension_numbers=dims,
                            precision=lax.Precision.HIGHEST,
                            preferred_element_type=jnp.float32)
    else:
        if q.dtype != compute_dtype:
            q = q.astype(compute_dtype)
            k = k.astype(compute_dtype)
        s = lax.dot_general(q, k, dimension_numbers=dims,
                            preferred_element_type=jnp.float32)
    s = s * scale                                            # (BT, TQ, SK_PAD) f32

    sk_pad = out_ref.shape[-1]
    if s_valid < sk_pad:
        # Mask padded key columns so the softmax denominator is correct.
        col = lax.broadcasted_iota(jnp.int32, s.shape, dimension=2)
        s = jnp.where(col < s_valid, s, -jnp.inf)

    # Numerically stable softmax over the key axis, kept in f32.
    m = jnp.max(s, axis=-1, keepdims=True)
    p = jnp.exp(s - m)
    denom = jnp.sum(p, axis=-1, keepdims=True)
    inv = pl.reciprocal(denom, approx=False)     # one divide per row, not per element
    out_ref[...] = (p * inv).astype(out_ref.dtype)


def attention_bias_pallas(node_enc, *, out_dtype=jnp.bfloat16,
                          compute_dtype=jnp.bfloat16):
    """softmax(node_enc @ node_enc^T / sqrt(D), axis=-1) -> (B, S, S).

    out_dtype defaults to bf16 because the (B, S, S) writeback dominates HBM
    traffic on v5e/v6e/v7x; pass out_dtype=float32, compute_dtype=None for an
    exact path.
    """
    B, S, D = node_enc.shape
    scale = 1.0 / math.sqrt(D)

    # Cast MXU inputs in the wrapper (halves the node_enc HBM read when bf16).
    if (compute_dtype is not None and
            jnp.dtype(compute_dtype).itemsize < jnp.dtype(node_enc.dtype).itemsize):
        node_enc = node_enc.astype(compute_dtype)

    in_bytes = jnp.dtype(node_enc.dtype).itemsize
    out_bytes = jnp.dtype(out_dtype).itemsize

    tile_budget, vmem_limit = _vmem_budget()
    sq_pad, sk_pad, tq, bt = _plan_tiles(
        B, S, D, in_bytes, out_bytes, budget_bytes=tile_budget, kv_buffers=1)

    # One padded copy of node_enc serves both operands: key axis 128-padded for
    # lane-dense stores; the query grid only walks the first sq_pad (8/16
    # aligned) rows, so query-side padding does not inflate compute/writeback.
    if sk_pad != S:
        node_enc = jnp.pad(node_enc, ((0, 0), (0, sk_pad - S), (0, 0)))

    kernel = functools.partial(
        _attention_bias_kernel,
        s_valid=S, scale=scale, compute_dtype=compute_dtype)

    grid_b = B // bt
    grid_q = sq_pad // tq
    # Shard the batch axis across TensorCores (both cores would otherwise fetch
    # the same kv slab); parallel dims must precede arbitrary dims.
    dims_sem = ("parallel", "arbitrary") if grid_b >= 2 else ("parallel", "parallel")

    flops = 2 * B * sq_pad * sk_pad * D
    bytes_accessed = (B * sq_pad * D * in_bytes             # query tiles
                      + B * sk_pad * D * in_bytes           # key slab (1x / batch blk)
                      + B * sq_pad * sk_pad * out_bytes)    # output writeback

    def build(kv_pipeline_mode):
        kv_kwargs = {}
        if kv_pipeline_mode is not None:
            kv_kwargs["pipeline_mode"] = kv_pipeline_mode
        return pl.pallas_call(
            kernel,
            out_shape=jax.ShapeDtypeStruct((B, sq_pad, sk_pad), out_dtype),
            grid_spec=pltpu.PrefetchScalarGridSpec(
                num_scalar_prefetch=0,
                grid=(grid_b, grid_q),
                in_specs=[
                    pl.BlockSpec((bt, tq, D), lambda b, q: (b, q, 0)),     # query tile
                    pl.BlockSpec((bt, sk_pad, D), lambda b, q: (b, 0, 0),  # key slab
                                 **kv_kwargs),
                ],
                out_specs=pl.BlockSpec((bt, tq, sk_pad), lambda b, q: (b, q, 0)),
            ),
            compiler_params=pltpu.CompilerParams(
                dimension_semantics=dims_sem,
                vmem_limit_bytes=vmem_limit,
            ),
            cost_estimate=pl.CostEstimate(
                flops=flops,
                transcendentals=B * sq_pad * sk_pad,
                bytes_accessed=bytes_accessed,
            ),
        )

    try:
        # Single-buffer the key slab: its block index only changes with the
        # (outer) batch grid axis, so a second buffer only wastes VMEM.
        out_pad = build(pl.Buffered(1))(node_enc, node_enc)
    except Exception:
        # Fallback for Pallas versions without BlockSpec(pipeline_mode=...).
        out_pad = build(None)(node_enc, node_enc)

    if (sq_pad, sk_pad) != (S, S):
        # NOTE: consumers that can accept the padded (B, sq_pad, sk_pad) result
        # should take `out_pad` directly and skip this copy.
        out_pad = out_pad[:, :S, :S]
    return out_pad


def init_params(key, num_node_types, enc_dim, num_heads):
    # NodeEncoding(num_node_types, enc_dim*num_heads) modeled as an embedding
    # table of shape (num_node_types, enc_dim*num_heads), deterministic init.
    D = int(enc_dim * num_heads)
    table = 0.02 * jax.random.normal(key, (num_node_types, D), dtype=jnp.float32)
    return {"node_embedding": table}


def attention_bias_forward(params, node_idx, *, out_dtype=jnp.bfloat16,
                           compute_dtype=jnp.bfloat16):
    # Glue: embedding lookup (gather) in plain JAX; hot path in Pallas.
    node_enc = jnp.take(params["node_embedding"], node_idx, axis=0)  # (B, S, D)
    return attention_bias_pallas(node_enc, out_dtype=out_dtype,
                                 compute_dtype=compute_dtype)


def _reference(params, node_idx):
    node_enc = jnp.take(params["node_embedding"], node_idx, axis=0)
    d = node_enc.shape[-1]
    s = jnp.einsum("bsd,btd->bst", node_enc, node_enc) / math.sqrt(d)
    return jax.nn.softmax(s, axis=-1)


if __name__ == "__main__":
    key = jax.random.PRNGKey(0)
    k_emb, k_idx = jax.random.split(key)

    num_node_types = 10
    enc_dim = 8
    num_heads = 4
    B, S = 2, 8

    params = init_params(k_emb, num_node_types, enc_dim, num_heads)
    node_idx = jax.random.randint(k_idx, (B, S), 0, num_node_types, dtype=jnp.int32)

    ref = _reference(params, node_idx)

    # Exact path: f32 MXU (precision=HIGHEST) + f32 output -> strict check.
    out_f32 = attention_bias_forward(params, node_idx,
                                     out_dtype=jnp.float32, compute_dtype=None)
    out_f32 = jax.block_until_ready(out_f32)
    assert out_f32.shape == (B, S, S)
    assert jnp.allclose(out_f32, ref, atol=1e-5, rtol=1e-5)

    # Fast (default) path: bf16 MXU inputs (f32 accumulate) + bf16 writeback.
    out_bf16 = attention_bias_forward(params, node_idx)
    out_bf16 = jax.block_until_ready(out_bf16)
    assert out_bf16.shape == (B, S, S)
    assert out_bf16.dtype == jnp.bfloat16
    assert jnp.allclose(out_bf16.astype(jnp.float32), ref, atol=2e-2, rtol=2e-2)

    print("KERNEL_OK")
</pallas_src>

<mosaic_0001>
module attributes {stable_mosaic.version = 11 : i64} {
  func.func @_attention_bias_kernel(%arg0: i32, %arg1: i32, %arg2: memref<2x8x32xf32, #tpu.memory_space<vmem>>, %arg3: memref<2x128x32xf32, #tpu.memory_space<vmem>>, %arg4: memref<2x8x128xf32, #tpu.memory_space<vmem>>) attributes {dimension_semantics = [#tpu.dimension_semantics<parallel>, #tpu.dimension_semantics<parallel>], iteration_bounds = array<i64: 1, 1>, scalar_prefetch = 0 : i64, scratch_operands = 0 : i64, tpu.core_type = #tpu.core_type<tc>, window_params = [{transform_indices = @transform_0, window_bounds = array<i64: 2, 8, 32>}, {pipeline_mode = #tpu.pipeline_mode<synchronous>, transform_indices = @transform_1, window_bounds = array<i64: 2, 128, 32>}, {transform_indices = @transform_2, window_bounds = array<i64: 2, 8, 128>}]} {
    %c0 = arith.constant 0 : index
    %c0_0 = arith.constant 0 : index
    %c0_1 = arith.constant 0 : index
    %0 = vector.load %arg2[%c0, %c0_0, %c0_1] : memref<2x8x32xf32, #tpu.memory_space<vmem>>, vector<2x8x32xf32>
    %c0_2 = arith.constant 0 : index
    %c0_3 = arith.constant 0 : index
    %c0_4 = arith.constant 0 : index
    %1 = vector.load %arg3[%c0_2, %c0_3, %c0_4] : memref<2x128x32xf32, #tpu.memory_space<vmem>>, vector<2x128x32xf32>
    %cst = arith.constant dense<0.000000e+00> : vector<2x8x128xf32>
    %2 = tpu.matmul %0, %1, %cst {dimension_numbers = #tpu.dot_dimension_numbers<[2], [2], [1], [1], [0, 0, 0, 1, 1, 1], [0], [0]>, precision = #tpu.contract_precision<fp32>} : vector<2x8x32xf32>, vector<2x128x32xf32>, vector<2x8x128xf32> -> vector<2x8x128xf32>
    %cst_5 = arith.constant 0.176776692 : f32
    %3 = vector.broadcast %cst_5 : f32 to vector<2x8x128xf32>
    %4 = arith.mulf %2, %3 : vector<2x8x128xf32>
    %5 = tpu.iota {dimensions = array<i32: 2>} : vector<2x8x128xi32>
    %c8_i32 = arith.constant 8 : i32
    %6 = vector.broadcast %c8_i32 : i32 to vector<2x8x128xi32>
    %7 = arith.cmpi slt, %5, %6 : vector<2x8x128xi32>
    %cst_6 = arith.constant 0xFF800000 : f32
    %8 = vector.broadcast %cst_6 : f32 to vector<2x8x128xf32>
    %9 = arith.select %7, %4, %8 : vector<2x8x128xi1>, vector<2x8x128xf32>
    %cst_7 = arith.constant dense<0xFF800000> : vector<2x8xf32>
    %10 = vector.multi_reduction <maximumf>, %9, %cst_7 [2] : vector<2x8x128xf32> to vector<2x8xf32>
    %11 = vector.shape_cast %10 : vector<2x8xf32> to vector<2x8x1xf32>
    %12 = vector.broadcast %11 : vector<2x8x1xf32> to vector<2x8x128xf32>
    %13 = arith.subf %9, %12 : vector<2x8x128xf32>
    %14 = math.exp %13 : vector<2x8x128xf32>
    %cst_8 = arith.constant dense<0.000000e+00> : vector<2x8xf32>
    %15 = vector.multi_reduction <add>, %14, %cst_8 [2] : vector<2x8x128xf32> to vector<2x8xf32>
    %16 = vector.shape_cast %15 : vector<2x8xf32> to vector<2x8x1xf32>
    %17 = tpu.reciprocal %16 : vector<2x8x1xf32> -> vector<2x8x1xf32>
    %18 = vector.broadcast %17 : vector<2x8x1xf32> to vector<2x8x128xf32>
    %19 = arith.mulf %14, %18 : vector<2x8x128xf32>
    %c0_9 = arith.constant 0 : index
    %c0_10 = arith.constant 0 : index
    %c0_11 = arith.constant 0 : index
    %20 = vector.load %arg4[%c0_9, %c0_10, %c0_11] : memref<2x8x128xf32, #tpu.memory_space<vmem>>, vector<2x8x128xf32>
    tpu.vector_store %arg4[%c0_9, %c0_10, %c0_11], %19 {strides = array<i32>} : memref<2x8x128xf32, #tpu.memory_space<vmem>>, vector<2x8x128xf32>,
    return
  }
  func.func @transform_0(%arg0: i32, %arg1: i32) -> (i32, i32, i32) {
    %c0_i32 = arith.constant 0 : i32
    %c0_i32_0 = arith.constant 0 : i32
    return %arg0, %arg1, %c0_i32 : i32, i32, i32
  }
  func.func @transform_1(%arg0: i32, %arg1: i32) -> (i32, i32, i32) {
    %c0_i32 = arith.constant 0 : i32
    %c0_i32_0 = arith.constant 0 : i32
    %c0_i32_1 = arith.constant 0 : i32
    return %arg0, %c0_i32, %c0_i32_0 : i32, i32, i32
  }
  func.func @transform_2(%arg0: i32, %arg1: i32) -> (i32, i32, i32) {
    %c0_i32 = arith.constant 0 : i32
    %c0_i32_0 = arith.constant 0 : i32
    return %arg0, %arg1, %c0_i32 : i32, i32, i32
  }
}

module attributes {stable_mosaic.version = 11 : i64} {
  func.func @_attention_bias_kernel(%arg0: i32, %arg1: i32, %arg2: memref<2x8x32xf32, #tpu.memory_space<vmem>>, %arg3: memref<2x128x32xf32, #tpu.memory_space<vmem>>, %arg4: memref<2x8x128xf32, #tpu.memory_space<vmem>>) attributes {dimension_semantics = [#tpu.dimension_semantics<parallel>, #tpu.dimension_semantics<parallel>], iteration_bounds = array<i64: 1, 1>, scalar_prefetch = 0 : i64, scratch_operands = 0 : i64, tpu.core_type = #tpu.core_type<tc>, window_params = [{transform_indices = @transform_0, window_bounds = array<i64: 2, 8, 32>}, {transform_indices = @transform_1, window_bounds = array<i64: 2, 128, 32>}, {transform_indices = @transform_2, window_bounds = array<i64: 2, 8, 128>}]} {
    %c0 = arith.constant 0 : index
    %c0_0 = arith.constant 0 : index
    %c0_1 = arith.constant 0 : index
    %0 = vector.load %arg2[%c0, %c0_0, %c0_1] : memref<2x8x32xf32, #tpu.memory_space<vmem>>, vector<2x8x32xf32>
    %c0_2 = arith.constant 0 : index
    %c0_3 = arith.constant 0 : index
    %c0_4 = arith.constant 0 : index
    %1 = vector.load %arg3[%c0_2, %c0_3, %c0_4] : memref<2x128x32xf32, #tpu.memory_space<vmem>>, vector<2x128x32xf32>
    %cst = arith.constant dense<0.000000e+00> : vector<2x8x128xf32>
    %2 = tpu.matmul %0, %1, %cst {dimension_numbers = #tpu.dot_dimension_numbers<[2], [2], [1], [1], [0, 0, 0, 1, 1, 1], [0], [0]>, precision = #tpu.contract_precision<fp32>} : vector<2x8x32xf32>, vector<2x128x32xf32>, vector<2x8x128xf32> -> vector<2x8x128xf32>
    %cst_5 = arith.constant 0.176776692 : f32
    %3 = vector.broadcast %cst_5 : f32 to vector<2x8x128xf32>
    %4 = arith.mulf %2, %3 : vector<2x8x128xf32>
    %5 = tpu.iota {dimensions = array<i32: 2>} : vector<2x8x128xi32>
    %c8_i32 = arith.constant 8 : i32
    %6 = vector.broadcast %c8_i32 : i32 to vector<2x8x128xi32>
    %7 = arith.cmpi slt, %5, %6 : vector<2x8x128xi32>
    %cst_6 = arith.constant 0xFF800000 : f32
    %8 = vector.broadcast %cst_6 : f32 to vector<2x8x128xf32>
    %9 = arith.select %7, %4, %8 : vector<2x8x128xi1>, vector<2x8x128xf32>
    %cst_7 = arith.constant dense<0xFF800000> : vector<2x8xf32>
    %10 = vector.multi_reduction <maximumf>, %9, %cst_7 [2] : vector<2x8x128xf32> to vector<2x8xf32>
    %11 = vector.shape_cast %10 : vector<2x8xf32> to vector<2x8x1xf32>
    %12 = vector.broadcast %11 : vector<2x8x1xf32> to vector<2x8x128xf32>
    %13 = arith.subf %9, %12 : vector<2x8x128xf32>
    %14 = math.exp %13 : vector<2x8x128xf32>
    %cst_8 = arith.constant dense<0.000000e+00> : vector<2x8xf32>
    %15 = vector.multi_reduction <add>, %14, %cst_8 [2] : vector<2x8x128xf32> to vector<2x8xf32>
    %16 = vector.shape_cast %15 : vector<2x8xf32> to vector<2x8x1xf32>
    %17 = tpu.reciprocal %16 : vector<2x8x1xf32> -> vector<2x8x1xf32>
    %18 = vector.broadcast %17 : vector<2x8x1xf32> to vector<2x8x128xf32>
    %19 = arith.mulf %14, %18 : vector<2x8x128xf32>
    %c0_9 = arith.constant 0 : index
    %c0_10 = arith.constant 0 : index
    %c0_11 = arith.constant 0 : index
    %20 = vector.load %arg4[%c0_9, %c0_10, %c0_11] : memref<2x8x128xf32, #tpu.memory_space<vmem>>, vector<2x8x128xf32>
    tpu.vector_store %arg4[%c0_9, %c0_10, %c0_11], %19 {strides = array<i32>} : memref<2x8x128xf32, #tpu.memory_space<vmem>>, vector<2x8x128xf32>,
    return
  }
  func.func @transform_0(%arg0: i32, %arg1: i32) -> (i32, i32, i32) {
    %c0_i32 = arith.constant 0 : i32
    %c0_i32_0 = arith.constant 0 : i32
    return %arg0, %arg1, %c0_i32 : i32, i32, i32
  }
  func.func @transform_1(%arg0: i32, %arg1: i32) -> (i32, i32, i32) {
    %c0_i32 = arith.constant 0 : i32
    %c0_i32_0 = arith.constant 0 : i32
    %c0_i32_1 = arith.constant 0 : i32
    return %arg0, %c0_i32, %c0_i32_0 : i32, i32, i32
  }
  func.func @transform_2(%arg0: i32, %arg1: i32) -> (i32, i32, i32) {
    %c0_i32 = arith.constant 0 : i32
    %c0_i32_0 = arith.constant 0 : i32
    return %arg0, %arg1, %c0_i32 : i32, i32, i32
  }
}

</mosaic_0001>

<llo_original>
// kernel: tpu_custom_call.1
$region0: #{tpu_custom_call.1}
  #allocation0 [shape = 'u32[]', space=smem, size = 0x4, offset = 0x4, fixed_abs, tag = 'smem constant byte address 0x4 - core index']
  #allocation1 [shape = 'u32[144,128]{1,0:T(1,128)}', space=vmem, size = 0x12000, scoped, tag = 'internal scratch']
  %s0 = inlined_call_operand.vmem [shape: f32[2,128,32], index: 0, kind: input, shape index: {}]
  %s1 = inlined_call_operand.vmem [shape: f32[2,128,32], index: 1, kind: input, shape index: {}]
  %s2 = inlined_call_operand.hbm [shape: f32[2,8,128], index: 2, kind: output, shape index: {}]
  %s3 = sld [smem:[#allocation0]]
  $region56: #{tpu_custom_call.1} parent=0
    _
  %s5 = ssub.s32 1, %s3
  %s6 = scalar_select 0, %s5, %s3
  $region1: #{tpu_custom_call.1} parent=0
    #allocation2 [shape = 'u8[8192]{0}', space=vmem, size = 0x2000, scoped, tag = 'input window, operand 0, single buffered']
    #allocation3 [shape = 'u8[8192]{0}', space=vmem, size = 0x2000, scoped, tag = 'output window, operand 0, single buffered']
    #allocation4 [shape = 's32[1]{0}', space=sflag, size = 0x4, scoped, tag = 'scoped memory for tpu_custom_call.1']
    %7 = vsyncpa [#allocation4], 0
    // Predicated region
    $region2: #{tpu_custom_call.1} parent=1 // pred_check
      _
    $region3: #{tpu_custom_call.1} parent=1 // pred_check_branch
      %9 = sbr.rel (0) target = $region5
    $region4: #{tpu_custom_call.1} parent=1 // pred_region
      // Predicated region
      $region6: #{tpu_custom_call.1} parent=4 // pred_check
        _
      $region7: #{tpu_custom_call.1} parent=4 // pred_check_branch
        %11 = sbr.rel (0) target = $region9
      $region8: #{tpu_custom_call.1} parent=4 // pred_region
        // Predicated region
        $region10: #{tpu_custom_call.1} parent=8 // pred_check
          _
        $region11: #{tpu_custom_call.1} parent=8 // pred_check_branch
          %13 = sbr.rel (0) target = $region13
        $region12: #{tpu_custom_call.1} parent=8 // pred_region
          // Predicated region
          $region25: #{tpu_custom_call.1} parent=12 // pred_check
            _
          $region26: #{tpu_custom_call.1} parent=12 // pred_check_branch
            %30 = sbr.rel (0) target = $region28
          $region27: #{tpu_custom_call.1} parent=12 // pred_region
            loop: start=0, step=1, limit=1
            $region29: #{tpu_custom_call.1} parent=27 // loop_pre_header
              _
            $region30: #{tpu_custom_call.1} parent=27 // loop_header
              %s32 = sphi 0, %s36
              %p33 = scmp.ge.s32.totalorder %s32, 1
              %s37 = sphi %s0, %s0
              %s38 = sphi [#allocation2], [#allocation2]
            $region31: #{tpu_custom_call.1} parent=27 // loop_header_branch
              %35 = sbr.rel (%p33) target = $region35
            $region32: #{tpu_custom_call.1} parent=27 // loop_body
              %v39 = vld [vmem:[%s37] sm:$0xff]
              %40 = vst [vmem:[%s38] sm:$0xff] %v39
              %v41 = vld [vmem:[%s37 + $0x80] sm:$0xff]
              %42 = vst [vmem:[%s38 + $0x8] sm:$0xff] %v41
            $region33: #{tpu_custom_call.1} parent=27 // loop_footer
              %s36 = sadd.s32 1, %s32
            $region34: #{tpu_custom_call.1} parent=27 // loop_footer_branch
              %31 = sbr.rel target = $region30
            $region35: #{tpu_custom_call.1} parent=27 // loop_exit
              _
          $region28: #{tpu_custom_call.1} parent=12 // pred_fallthru
            _
          // Predicated region
          $region36: #{tpu_custom_call.1} parent=12 // pred_check
            _
          $region37: #{tpu_custom_call.1} parent=12 // pred_check_branch
            %44 = sbr.rel target = $region39
          $region38: #{tpu_custom_call.1} parent=12 // pred_region
            _
          $region39: #{tpu_custom_call.1} parent=12 // pred_fallthru
            _
        $region13: #{tpu_custom_call.1} parent=8 // pred_fallthru
          _
        // Predicated region
        $region14: #{tpu_custom_call.1} parent=8 // pred_check
          _
        $region15: #{tpu_custom_call.1} parent=8 // pred_check_branch
          %15 = sbr.rel target = $region17
        $region16: #{tpu_custom_call.1} parent=8 // pred_region
          loop: start=0, step=1, limit=1
          $region18: #{tpu_custom_call.1} parent=16 // loop_pre_header
            _
          $region19: #{tpu_custom_call.1} parent=16 // loop_header
            %s18 = sphi 0, %s22
            %p19 = scmp.ge.s32.totalorder %s18, 1
            %s23 = sphi %s0, %s0
            %s24 = sphi [#allocation2], [#allocation2]
          $region20: #{tpu_custom_call.1} parent=16 // loop_header_branch
            %21 = sbr.rel (%p19) target = $region24
          $region21: #{tpu_custom_call.1} parent=16 // loop_body
            %v25 = vld [vmem:[%s23] sm:$0xff]
            %26 = vst [vmem:[%s24] sm:$0xff] %v25
            %v27 = vld [vmem:[%s23 + $0x80] sm:$0xff]
            %28 = vst [vmem:[%s24 + $0x8] sm:$0xff] %v27
          $region22: #{tpu_custom_call.1} parent=16 // loop_footer
            %s22 = sadd.s32 1, %s18
          $region23: #{tpu_custom_call.1} parent=16 // loop_footer_branch
            %17 = sbr.rel target = $region19
          $region24: #{tpu_custom_call.1} parent=16 // loop_exit
            _
        $region17: #{tpu_custom_call.1} parent=8 // pred_fallthru
          _
      $region9: #{tpu_custom_call.1} parent=4 // pred_fallthru
        _
      %45 = vnop
    $region5: #{tpu_custom_call.1} parent=1 // pred_fallthru
      _
    // Predicated region
    $region40: #{tpu_custom_call.1} parent=1 // pred_check
      _
    $region41: #{tpu_custom_call.1} parent=1 // pred_check_branch
      %47 = sbr.rel (0) target = $region43
    $region42: #{tpu_custom_call.1} parent=1 // pred_region
      _
    $region43: #{tpu_custom_call.1} parent=1 // pred_fallthru
      _
    // Predicated region
    $region44: #{tpu_custom_call.1} parent=1 // pred_check
      _
    $region45: #{tpu_custom_call.1} parent=1 // pred_check_branch
      %49 = sbr.rel (0) target = $region47
    $region46: #{tpu_custom_call.1} parent=1 // pred_region
      _
    $region47: #{tpu_custom_call.1} parent=1 // pred_fallthru
      _
    %v50 = vld [vmem:[#allocation2] sm:$0xff]
    %v51 = vld [vmem:[#allocation2 + $0x8] sm:$0xff]
    %v52 = vld [vmem:[%s1] sm:$0xff]
    %v53 = vld [vmem:[%s1 + $0x8] sm:$0xff]
    %v54 = vld [vmem:[%s1 + $0x10] sm:$0xff]
    %v55 = vld [vmem:[%s1 + $0x18] sm:$0xff]
    %v56 = vld [vmem:[%s1 + $0x20] sm:$0xff]
    %v57 = vld [vmem:[%s1 + $0x28] sm:$0xff]
    %v58 = vld [vmem:[%s1 + $0x30] sm:$0xff]
    %v59 = vld [vmem:[%s1 + $0x38] sm:$0xff]
    %v60 = vld [vmem:[%s1 + $0x40] sm:$0xff]
    %v61 = vld [vmem:[%s1 + $0x48] sm:$0xff]
    %v62 = vld [vmem:[%s1 + $0x50] sm:$0xff]
    %v63 = vld [vmem:[%s1 + $0x58] sm:$0xff]
    %v64 = vld [vmem:[%s1 + $0x60] sm:$0xff]
    %v65 = vld [vmem:[%s1 + $0x68] sm:$0xff]
    %v66 = vld [vmem:[%s1 + $0x70] sm:$0xff]
    %v67 = vld [vmem:[%s1 + $0x78] sm:$0xff]
    %v68 = vld [vmem:[%s1 + $0x80] sm:$0xff]
    %v69 = vld [vmem:[%s1 + $0x88] sm:$0xff]
    %v70 = vld [vmem:[%s1 + $0x90] sm:$0xff]
    %v71 = vld [vmem:[%s1 + $0x98] sm:$0xff]
    %v72 = vld [vmem:[%s1 + $0xa0] sm:$0xff]
    %v73 = vld [vmem:[%s1 + $0xa8] sm:$0xff]
    %v74 = vld [vmem:[%s1 + $0xb0] sm:$0xff]
    %v75 = vld [vmem:[%s1 + $0xb8] sm:$0xff]
    %v76 = vld [vmem:[%s1 + $0xc0] sm:$0xff]
    %v77 = vld [vmem:[%s1 + $0xc8] sm:$0xff]
    %v78 = vld [vmem:[%s1 + $0xd0] sm:$0xff]
    %v79 = vld [vmem:[%s1 + $0xd8] sm:$0xff]
    %v80 = vld [vmem:[%s1 + $0xe0] sm:$0xff]
    %v81 = vld [vmem:[%s1 + $0xe8] sm:$0xff]
    %v82 = vld [vmem:[%s1 + $0xf0] sm:$0xff]
    %v83 = vld [vmem:[%s1 + $0xf8] sm:$0xff]
    %vm84 = vcmask 261120
    %v86 = vsel %vm84, %v50, 0
    %v89 = vsel %vm84, %v52, 0
    %v92 = vsel %vm84, %v53, 0
    %v95 = vsel %vm84, %v54, 0
    %v98 = vsel %vm84, %v55, 0
    %v101 = vsel %vm84, %v56, 0
    %v104 = vsel %vm84, %v57, 0
    %v107 = vsel %vm84, %v58, 0
    %v110 = vsel %vm84, %v59, 0
    %v113 = vsel %vm84, %v60, 0
    %v116 = vsel %vm84, %v61, 0
    %v119 = vsel %vm84, %v62, 0
    %v122 = vsel %vm84, %v63, 0
    %v125 = vsel %vm84, %v64, 0
    %v128 = vsel %vm84, %v65, 0
    %v131 = vsel %vm84, %v66, 0
    %v134 = vsel %vm84, %v67, 0
    %136 = vmatprep.subr.mxu0 0.0
    %v137 = vand.u32 %v89, 4294901760
    %138 = vmatpush1.xpose.msra.mxu0 %v137
    %139 = vmatprep.subr.mxu0 0.0
    %v140 = vand.u32 %v92, 4294901760
    %141 = vmatpush1.xpose.msra.mxu0 %v140
    %142 = vmatprep.subr.mxu0 0.0
    %v143 = vand.u32 %v95, 4294901760
    %144 = vmatpush1.xpose.msra.mxu0 %v143
    %145 = vmatprep.subr.mxu0 0.0
    %v146 = vand.u32 %v98, 4294901760
    %147 = vmatpush1.xpose.msra.mxu0 %v146
    %148 = vmatprep.subr.mxu0 0.0
    %v149 = vand.u32 %v101, 4294901760
    %150 = vmatpush1.xpose.msra.mxu0 %v149
    %151 = vmatprep.subr.mxu0 0.0
    %v152 = vand.u32 %v104, 4294901760
    %153 = vmatpush1.xpose.msra.mxu0 %v152
    %154 = vmatprep.subr.mxu0 0.0
    %v155 = vand.u32 %v107, 4294901760
    %156 = vmatpush1.xpose.msra.mxu0 %v155
    %157 = vmatprep.subr.mxu0 0.0
    %v158 = vand.u32 %v110, 4294901760
    %159 = vmatpush1.xpose.msra.mxu0 %v158
    %160 = vmatprep.subr.mxu0 0.0
    %v161 = vand.u32 %v113, 4294901760
    %162 = vmatpush1.xpose.msra.mxu0 %v161
    %163 = vmatprep.subr.mxu0 0.0
    %v164 = vand.u32 %v116, 4294901760
    %165 = vmatpush1.xpose.msra.mxu0 %v164
    %166 = vmatprep.subr.mxu0 0.0
    %v167 = vand.u32 %v119, 4294901760
    %168 = vmatpush1.xpose.msra.mxu0 %v167
    %169 = vmatprep.subr.mxu0 0.0
    %v170 = vand.u32 %v122, 4294901760
    %171 = vmatpush1.xpose.msra.mxu0 %v170
    %172 = vmatprep.subr.mxu0 0.0
    %v173 = vand.u32 %v125, 4294901760
    %174 = vmatpush1.xpose.msra.mxu0 %v173
    %175 = vmatprep.subr.mxu0 0.0
    %v176 = vand.u32 %v128, 4294901760
    %177 = vmatpush1.xpose.msra.mxu0 %v176
    %178 = vmatprep.subr.mxu0 0.0
    %v179 = vand.u32 %v131, 4294901760
    %180 = vmatpush1.xpose.msra.mxu0 %v179
    %181 = vmatprep.subr.mxu0 0.0
    %v182 = vand.u32 %v134, 4294901760
    %183 = vmatpush1.xpose.msra.mxu0 %v182
    %184 = vmatprep.subr.mxu0 0.0
    %185 = vmatpush1.xpose.msra.mxu0 0.0
    %186 = vmatprep.subr.mxu0 0.0
    %187 = vmatpush1.xpose.msra.mxu0 0.0
    %188 = vmatprep.subr.mxu0 0.0
    %189 = vmatpush1.xpose.msra.mxu0 0.0
    %190 = vmatprep.subr.mxu0 0.0
    %191 = vmatpush1.xpose.msra.mxu0 0.0
    %192 = vmatprep.subr.mxu0 0.0
    %193 = vmatpush1.xpose.msra.mxu0 0.0
    %194 = vmatprep.subr.mxu0 0.0
    %195 = vmatpush1.xpose.msra.mxu0 0.0
    %196 = vmatprep.subr.mxu0 0.0
    %197 = vmatpush1.xpose.msra.mxu0 0.0
    %198 = vmatprep.subr.mxu0 0.0
    %199 = vmatpush1.xpose.msra.mxu0 0.0
    %200 = vmatprep.subr.mxu0 0.0
    %201 = vmatpush1.xpose.msra.mxu0 0.0
    %202 = vmatprep.subr.mxu0 0.0
    %203 = vmatpush1.xpose.msra.mxu0 0.0
    %204 = vmatprep.subr.mxu0 0.0
    %205 = vmatpush1.xpose.msra.mxu0 0.0
    %206 = vmatprep.subr.mxu0 0.0
    %207 = vmatpush1.xpose.msra.mxu0 0.0
    %208 = vmatprep.subr.mxu0 0.0
    %209 = vmatpush1.xpose.msra.mxu0 0.0
    %210 = vmatprep.subr.mxu0 0.0
    %211 = vmatpush1.xpose.msra.mxu0 0.0
    %212 = vmatprep.subr.mxu0 0.0
    %213 = vmatpush1.xpose.msra.mxu0 0.0
    %214 = vmatprep.subr.mxu0 0.0
    %215 = vmatpush1.xpose.msra.mxu0 0.0
    %216 = vmatprep.mubr.f32.mxu0 0.0
    %v217 = vand.u32 %v86, 4294901760
    %v218 = vsub.f32 %v86, %v217
    %v219 = vand.u32 %v218, 4294901760
    %v220 = vsub.f32 %v218, %v219
    %v221 = vand.u32 %v220, 4294901760
    %222 = vmatmul.mubr.f32.gmra.mrb[0].mxu0 %v221
    %v223 = vpop.f32.mrb[0].mxu0
    %v224 = vadd.f32 0.0, %v223
    %v225 = vpop.f32.mrb[0].mxu0
    %226 = vdwg.mxu0
    %227 = vmatprep.subr.mxu0 0.0
    %v228 = vand.u32 %v89, 4294901760
    %v229 = vsub.f32 %v89, %v228
    %v230 = vand.u32 %v229, 4294901760
    %v231 = vsub.f32 %v229, %v230
    %v232 = vand.u32 %v231, 4294901760
    %233 = vmatpush1.xpose.msra.mxu0 %v232
    %234 = vmatprep.subr.mxu0 0.0
    %v235 = vand.u32 %v92, 4294901760
    %v236 = vsub.f32 %v92, %v235
    %v237 = vand.u32 %v236, 4294901760
    %v238 = vsub.f32 %v236, %v237
    %v239 = vand.u32 %v238, 4294901760
    %240 = vmatpush1.xpose.msra.mxu0 %v239
    %241 = vmatprep.subr.mxu0 0.0
    %v242 = vand.u32 %v95, 4294901760
    %v243 = vsub.f32 %v95, %v242
    %v244 = vand.u32 %v243, 4294901760
    %v245 = vsub.f32 %v243, %v244
    %v246 = vand.u32 %v245, 4294901760
    %247 = vmatpush1.xpose.msra.mxu0 %v246
    %248 = vmatprep.subr.mxu0 0.0
    %v249 = vand.u32 %v98, 4294901760
    %v250 = vsub.f32 %v98, %v249
    %v251 = vand.u32 %v250, 4294901760
    %v252 = vsub.f32 %v250, %v251
    %v253 = vand.u32 %v252, 4294901760
    %254 = vmatpush1.xpose.msra.mxu0 %v253
    %255 = vmatprep.subr.mxu0 0.0
    %v256 = vand.u32 %v101, 4294901760
    %v257 = vsub.f32 %v101, %v256
    %v258 = vand.u32 %v257, 4294901760
    %v259 = vsub.f32 %v257, %v258
    %v260 = vand.u32 %v259, 4294901760
    %261 = vmatpush1.xpose.msra.mxu0 %v260
    %262 = vmatprep.subr.mxu0 0.0
    %v263 = vand.u32 %v104, 4294901760
    %v264 = vsub.f32 %v104, %v263
    %v265 = vand.u32 %v264, 4294901760
    %v266 = vsub.f32 %v264, %v265
    %v267 = vand.u32 %v266, 4294901760
    %268 = vmatpush1.xpose.msra.mxu0 %v267
    %269 = vmatprep.subr.mxu0 0.0
    %v270 = vand.u32 %v107, 4294901760
    %v271 = vsub.f32 %v107, %v270
    %v272 = vand.u32 %v271, 4294901760
    %v273 = vsub.f32 %v271, %v272
    %v274 = vand.u32 %v273, 4294901760
    %275 = vmatpush1.xpose.msra.mxu0 %v274
    %276 = vmatprep.subr.mxu0 0.0
    %v277 = vand.u32 %v110, 4294901760
    %v278 = vsub.f32 %v110, %v277
    %v279 = vand.u32 %v278, 4294901760
    %v280 = vsub.f32 %v278, %v279
    %v281 = vand.u32 %v280, 4294901760
    %282 = vmatpush1.xpose.msra.mxu0 %v281
    %283 = vmatprep.subr.mxu0 0.0
    %v284 = vand.u32 %v113, 4294901760
    %v285 = vsub.f32 %v113, %v284
    %v286 = vand.u32 %v285, 4294901760
    %v287 = vsub.f32 %v285, %v286
    %v288 = vand.u32 %v287, 4294901760
    %289 = vmatpush1.xpose.msra.mxu0 %v288
    %290 = vmatprep.subr.mxu0 0.0
    %v291 = vand.u32 %v116, 4294901760
    %v292 = vsub.f32 %v116, %v291
    %v293 = vand.u32 %v292, 4294901760
    %v294 = vsub.f32 %v292, %v293
    %v295 = vand.u32 %v294, 4294901760
    %296 = vmatpush1.xpose.msra.mxu0 %v295
    %297 = vmatprep.subr.mxu0 0.0
    %v298 = vand.u32 %v119, 4294901760
    %v299 = vsub.f32 %v119, %v298
    %v300 = vand.u32 %v299, 4294901760
    %v301 = vsub.f32 %v299, %v300
    %v302 = vand.u32 %v301, 4294901760
    %303 = vmatpush1.xpose.msra.mxu0 %v302
    %304 = vmatprep.subr.mxu0 0.0
    %v305 = vand.u32 %v122, 4294901760
    %v306 = vsub.f32 %v122, %v305
    %v307 = vand.u32 %v306, 4294901760
    %v308 = vsub.f32 %v306, %v307
    %v309 = vand.u32 %v308, 4294901760
    %310 = vmatpush1.xpose.msra.mxu0 %v309
    %311 = vmatprep.subr.mxu0 0.0
    %v312 = vand.u32 %v125, 4294901760
    %v313 = vsub.f32 %v125, %v312
    %v314 = vand.u32 %v313, 4294901760
    %v315 = vsub.f32 %v313, %v314
    %v316 = vand.u32 %v315, 4294901760
    %317 = vmatpush1.xpose.msra.mxu0 %v316
    %318 = vmatprep.subr.mxu0 0.0
    %v319 = vand.u32 %v128, 4294901760
    %v320 = vsub.f32 %v128, %v319
    %v321 = vand.u32 %v320, 4294901760
    %v322 = vsub.f32 %v320, %v321
    %v323 = vand.u32 %v322, 4294901760
    %324 = vmatpush1.xpose.msra.mxu0 %v323
    %325 = vmatprep.subr.mxu0 0.0
    %v326 = vand.u32 %v131, 4294901760
    %v327 = vsub.f32 %v131, %v326
    %v328 = vand.u32 %v327, 4294901760
    %v329 = vsub.f32 %v327, %v328
    %v330 = vand.u32 %v329, 4294901760
    %331 = vmatpush1.xpose.msra.mxu0 %v330
    %332 = vmatprep.subr.mxu0 0.0
    %v333 = vand.u32 %v134, 4294901760
    %v334 = vsub.f32 %v134, %v333
    %v335 = vand.u32 %v334, 4294901760
    %v336 = vsub.f32 %v334, %v335
    %v337 = vand.u32 %v336, 4294901760
    %338 = vmatpush1.xpose.msra.mxu0 %v337
    %339 = vmatprep.subr.mxu0 0.0
    %340 = vmatpush1.xpose.msra.mxu0 0.0
    %341 = vmatprep.subr.mxu0 0.0
    %342 = vmatpush1.xpose.msra.mxu0 0.0
    %343 = vmatprep.subr.mxu0 0.0
    %344 = vmatpush1.xpose.msra.mxu0 0.0
    %345 = vmatprep.subr.mxu0 0.0
    %346 = vmatpush1.xpose.msra.mxu0 0.0
    %347 = vmatprep.subr.mxu0 0.0
    %348 = vmatpush1.xpose.msra.mxu0 0.0
    %349 = vmatprep.subr.mxu0 0.0
    %350 = vmatpush1.xpose.msra.mxu0 0.0
    %351 = vmatprep.subr.mxu0 0.0
    %352 = vmatpush1.xpose.msra.mxu0 0.0
    %353 = vmatprep.subr.mxu0 0.0
    %354 = vmatpush1.xpose.msra.mxu0 0.0
    %355 = vmatprep.subr.mxu0 0.0
    %356 = vmatpush1.xpose.msra.mxu0 0.0
    %357 = vmatprep.subr.mxu0 0.0
    %358 = vmatpush1.xpose.msra.mxu0 0.0
    %359 = vmatprep.subr.mxu0 0.0
    %360 = vmatpush1.xpose.msra.mxu0 0.0
    %361 = vmatprep.subr.mxu0 0.0
    %362 = vmatpush1.xpose.msra.mxu0 0.0
    %363 = vmatprep.subr.mxu0 0.0
    %364 = vmatpush1.xpose.msra.mxu0 0.0
    %365 = vmatprep.subr.mxu0 0.0
    %366 = vmatpush1.xpose.msra.mxu0 0.0
    %367 = vmatprep.subr.mxu0 0.0
    %368 = vmatpush1.xpose.msra.mxu0 0.0
    %369 = vmatprep.subr.mxu0 0.0
    %370 = vmatpush1.xpose.msra.mxu0 0.0
    %371 = vmatprep.mubr.f32.mxu0 0.0
    %v372 = vand.u32 %v86, 4294901760
    %373 = vmatmul.mubr.f32.gmra.mrb[0].mxu0 %v372
    %v374 = vpop.f32.mrb[0].mxu0
    %v375 = vadd.f32 %v224, %v374
    %v376 = vpop.f32.mrb[0].mxu0
    %377 = vdwg.mxu0
    %378 = vmatprep.subr.mxu0 0.0
    %v379 = vand.u32 %v89, 4294901760
    %v380 = vsub.f32 %v89, %v379
    %381 = vmatpush1.xpose.msra.mxu0 %v380
    %382 = vmatprep.subr.mxu0 0.0
    %v383 = vand.u32 %v92, 4294901760
    %v384 = vsub.f32 %v92, %v383
    %385 = vmatpush1.xpose.msra.mxu0 %v384
    %386 = vmatprep.subr.mxu0 0.0
    %v387 = vand.u32 %v95, 4294901760
    %v388 = vsub.f32 %v95, %v387
    %389 = vmatpush1.xpose.msra.mxu0 %v388
    %390 = vmatprep.subr.mxu0 0.0
    %v391 = vand.u32 %v98, 4294901760
    %v392 = vsub.f32 %v98, %v391
    %393 = vmatpush1.xpose.msra.mxu0 %v392
    %394 = vmatprep.subr.mxu0 0.0
    %v395 = vand.u32 %v101, 4294901760
    %v396 = vsub.f32 %v101, %v395
    %397 = vmatpush1.xpose.msra.mxu0 %v396
    %398 = vmatprep.subr.mxu0 0.0
    %v399 = vand.u32 %v104, 4294901760
    %v400 = vsub.f32 %v104, %v399
    %401 = vmatpush1.xpose.msra.mxu0 %v400
    %402 = vmatprep.subr.mxu0 0.0
    %v403 = vand.u32 %v107, 4294901760
    %v404 = vsub.f32 %v107, %v403
    %405 = vmatpush1.xpose.msra.mxu0 %v404
    %406 = vmatprep.subr.mxu0 0.0
    %v407 = vand.u32 %v110, 4294901760
    %v408 = vsub.f32 %v110, %v407
    %409 = vmatpush1.xpose.msra.mxu0 %v408
    %410 = vmatprep.subr.mxu0 0.0
    %v411 = vand.u32 %v113, 4294901760
    %v412 = vsub.f32 %v113, %v411
    %413 = vmatpush1.xpose.msra.mxu0 %v412
    %414 = vmatprep.subr.mxu0 0.0
    %v415 = vand.u32 %v116, 4294901760
    %v416 = vsub.f32 %v116, %v415
    %417 = vmatpush1.xpose.msra.mxu0 %v416
    %418 = vmatprep.subr.mxu0 0.0
    %v419 = vand.u32 %v119, 4294901760
    %v420 = vsub.f32 %v119, %v419
    %421 = vmatpush1.xpose.msra.mxu0 %v420
    %422 = vmatprep.subr.mxu0 0.0
    %v423 = vand.u32 %v122, 4294901760
    %v424 = vsub.f32 %v122, %v423
    %425 = vmatpush1.xpose.msra.mxu0 %v424
    %426 = vmatprep.subr.mxu0 0.0
    %v427 = vand.u32 %v125, 4294901760
    %v428 = vsub.f32 %v125, %v427
    %429 = vmatpush1.xpose.msra.mxu0 %v428
    %430 = vmatprep.subr.mxu0 0.0
    %v431 = vand.u32 %v128, 4294901760
    %v432 = vsub.f32 %v128, %v431
    %433 = vmatpush1.xpose.msra.mxu0 %v432
    %434 = vmatprep.subr.mxu0 0.0
    %v435 = vand.u32 %v131, 4294901760
    %v436 = vsub.f32 %v131, %v435
    %437 = vmatpush1.xpose.msra.mxu0 %v436
    %438 = vmatprep.subr.mxu0 0.0
    %v439 = vand.u32 %v134, 4294901760
    %v440 = vsub.f32 %v134, %v439
    %441 = vmatpush1.xpose.msra.mxu0 %v440
    %442 = vmatprep.subr.mxu0 0.0
    %443 = vmatpush1.xpose.msra.mxu0 0.0
    %444 = vmatprep.subr.mxu0 0.0
    %445 = vmatpush1.xpose.msra.mxu0 0.0
    %446 = vmatprep.subr.mxu0 0.0
    %447 = vmatpush1.xpose.msra.mxu0 0.0
    %448 = vmatprep.subr.mxu0 0.0
    %449 = vmatpush1.xpose.msra.mxu0 0.0
    %450 = vmatprep.subr.mxu0 0.0
    %451 = vmatpush1.xpose.msra.mxu0 0.0
    %452 = vmatprep.subr.mxu0 0.0
    %453 = vmatpush1.xpose.msra.mxu0 0.0
    %454 = vmatprep.subr.mxu0 0.0
    %455 = vmatpush1.xpose.msra.mxu0 0.0
    %456 = vmatprep.subr.mxu0 0.0
    %457 = vmatpush1.xpose.msra.mxu0 0.0
    %458 = vmatprep.subr.mxu0 0.0
    %459 = vmatpush1.xpose.msra.mxu0 0.0
    %460 = vmatprep.subr.mxu0 0.0
    %461 = vmatpush1.xpose.msra.mxu0 0.0
    %462 = vmatprep.subr.mxu0 0.0
    %463 = vmatpush1.xpose.msra.mxu0 0.0
    %464 = vmatprep.subr.mxu0 0.0
    %465 = vmatpush1.xpose.msra.mxu0 0.0
    %466 = vmatprep.subr.mxu0 0.0
    %467 = vmatpush1.xpose.msra.mxu0 0.0
    %468 = vmatprep.subr.mxu0 0.0
    %469 = vmatpush1.xpose.msra.mxu0 0.0
    %470 = vmatprep.subr.mxu0 0.0
    %471 = vmatpush1.xpose.msra.mxu0 0.0
    %472 = vmatprep.subr.mxu0 0.0
    %473 = vmatpush1.xpose.msra.mxu0 0.0
    %474 = vmatprep.mubr.f32.mxu0 0.0
    %v475 = vand.u32 %v86, 4294901760
    %v476 = vsub.f32 %v86, %v475
    %477 = vmatmul.mubr.f32.gmra.mrb[0].mxu0 %v476
    %v478 = vpop.f32.mrb[0].mxu0
    %v479 = vadd.f32 %v375, %v478
    %v480 = vpop.f32.mrb[0].mxu0
    %481 = vdwg.mxu0
    %482 = vmatprep.subr.mxu0 0.0
    %v483 = vand.u32 %v89, 4294901760
    %484 = vmatpush1.xpose.msra.mxu0 %v483
    %485 = vmatprep.subr.mxu0 0.0
    %v486 = vand.u32 %v92, 4294901760
    %487 = vmatpush1.xpose.msra.mxu0 %v486
    %488 = vmatprep.subr.mxu0 0.0
    %v489 = vand.u32 %v95, 4294901760
    %490 = vmatpush1.xpose.msra.mxu0 %v489
    %491 = vmatprep.subr.mxu0 0.0
    %v492 = vand.u32 %v98, 4294901760
    %493 = vmatpush1.xpose.msra.mxu0 %v492
    %494 = vmatprep.subr.mxu0 0.0
    %v495 = vand.u32 %v101, 4294901760
    %496 = vmatpush1.xpose.msra.mxu0 %v495
    %497 = vmatprep.subr.mxu0 0.0
    %v498 = vand.u32 %v104, 4294901760
    %499 = vmatpush1.xpose.msra.mxu0 %v498
    %500 = vmatprep.subr.mxu0 0.0
    %v501 = vand.u32 %v107, 4294901760
    %502 = vmatpush1.xpose.msra.mxu0 %v501
    %503 = vmatprep.subr.mxu0 0.0
    %v504 = vand.u32 %v110, 4294901760
    %505 = vmatpush1.xpose.msra.mxu0 %v504
    %506 = vmatprep.subr.mxu0 0.0
    %v507 = vand.u32 %v113, 4294901760
    %508 = vmatpush1.xpose.msra.mxu0 %v507
    %509 = vmatprep.subr.mxu0 0.0
    %v510 = vand.u32 %v116, 4294901760
    %511 = vmatpush1.xpose.msra.mxu0 %v510
    %512 = vmatprep.subr.mxu0 0.0
    %v513 = vand.u32 %v119, 4294901760
    %514 = vmatpush1.xpose.msra.mxu0 %v513
    %515 = vmatprep.subr.mxu0 0.0
    %v516 = vand.u32 %v122, 4294901760
    %517 = vmatpush1.xpose.msra.mxu0 %v516
    %518 = vmatprep.subr.mxu0 0.0
    %v519 = vand.u32 %v125, 4294901760
    %520 = vmatpush1.xpose.msra.mxu0 %v519
    %521 = vmatprep.subr.mxu0 0.0
    %v522 = vand.u32 %v128, 4294901760
    %523 = vmatpush1.xpose.msra.mxu0 %v522
    %524 = vmatprep.subr.mxu0 0.0
    %v525 = vand.u32 %v131, 4294901760
    %526 = vmatpush1.xpose.msra.mxu0 %v525
    %527 = vmatprep.subr.mxu0 0.0
    %v528 = vand.u32 %v134, 4294901760
    %529 = vmatpush1.xpose.msra.mxu0 %v528
    %530 = vmatprep.subr.mxu0 0.0
    %531 = vmatpush1.xpose.msra.mxu0 0.0
    %532 = vmatprep.subr.mxu0 0.0
    %533 = vmatpush1.xpose.msra.mxu0 0.0
    %534 = vmatprep.subr.mxu0 0.0
    %535 = vmatpush1.xpose.msra.mxu0 0.0
    %536 = vmatprep.subr.mxu0 0.0
    %537 = vmatpush1.xpose.msra.mxu0 0.0
    %538 = vmatprep.subr.mxu0 0.0
    %539 = vmatpush1.xpose.msra.mxu0 0.0
    %540 = vmatprep.subr.mxu0 0.0
    %541 = vmatpush1.xpose.msra.mxu0 0.0
    %542 = vmatprep.subr.mxu0 0.0
    %543 = vmatpush1.xpose.msra.mxu0 0.0
    %544 = vmatprep.subr.mxu0 0.0
    %545 = vmatpush1.xpose.msra.mxu0 0.0
    %546 = vmatprep.subr.mxu0 0.0
    %547 = vmatpush1.xpose.msra.mxu0 0.0
    %548 = vmatprep.subr.mxu0 0.0
    %549 = vmatpush1.xpose.msra.mxu0 0.0
    %550 = vmatprep.subr.mxu0 0.0
    %551 = vmatpush1.xpose.msra.mxu0 0.0
    %552 = vmatprep.subr.mxu0 0.0
    %553 = vmatpush1.xpose.msra.mxu0 0.0
    %554 = vmatprep.subr.mxu0 0.0
    %555 = vmatpush1.xpose.msra.mxu0 0.0
    %556 = vmatprep.subr.mxu0 0.0
    %557 = vmatpush1.xpose.msra.mxu0 0.0
    %558 = vmatprep.subr.mxu0 0.0
    %559 = vmatpush1.xpose.msra.mxu0 0.0
    %560 = vmatprep.subr.mxu0 0.0
    %561 = vmatpush1.xpose.msra.mxu0 0.0
    %562 = vmatprep.mubr.f32.mxu0 0.0
    %v563 = vand.u32 %v86, 4294901760
    %v564 = vsub.f32 %v86, %v563
    %v565 = vand.u32 %v564, 4294901760
    %566 = vmatmul.mubr.f32.gmra.mrb[0].mxu0 %v565
    %v567 = vpop.f32.mrb[0].mxu0
    %v568 = vadd.f32 %v479, %v567
    %v569 = vpop.f32.mrb[0].mxu0
    %570 = vdwg.mxu0
    %571 = vmatprep.subr.mxu0 0.0
    %v572 = vand.u32 %v89, 4294901760
    %v573 = vsub.f32 %v89, %v572
    %v574 = vand.u32 %v573, 4294901760
    %575 = vmatpush1.xpose.msra.mxu0 %v574
    %576 = vmatprep.subr.mxu0 0.0
    %v577 = vand.u32 %v92, 4294901760
    %v578 = vsub.f32 %v92, %v577
    %v579 = vand.u32 %v578, 4294901760
    %580 = vmatpush1.xpose.msra.mxu0 %v579
    %581 = vmatprep.subr.mxu0 0.0
    %v582 = vand.u32 %v95, 4294901760
    %v583 = vsub.f32 %v95, %v582
    %v584 = vand.u32 %v583, 4294901760
    %585 = vmatpush1.xpose.msra.mxu0 %v584
    %586 = vmatprep.subr.mxu0 0.0
    %v587 = vand.u32 %v98, 4294901760
    %v588 = vsub.f32 %v98, %v587
    %v589 = vand.u32 %v588, 4294901760
    %590 = vmatpush1.xpose.msra.mxu0 %v589
    %591 = vmatprep.subr.mxu0 0.0
    %v592 = vand.u32 %v101, 4294901760
    %v593 = vsub.f32 %v101, %v592
    %v594 = vand.u32 %v593, 4294901760
    %595 = vmatpush1.xpose.msra.mxu0 %v594
    %596 = vmatprep.subr.mxu0 0.0
    %v597 = vand.u32 %v104, 4294901760
    %v598 = vsub.f32 %v104, %v597
    %v599 = vand.u32 %v598, 4294901760
    %600 = vmatpush1.xpose.msra.mxu0 %v599
    %601 = vmatprep.subr.mxu0 0.0
    %v602 = vand.u32 %v107, 4294901760
    %v603 = vsub.f32 %v107, %v602
    %v604 = vand.u32 %v603, 4294901760
    %605 = vmatpush1.xpose.msra.mxu0 %v604
    %606 = vmatprep.subr.mxu0 0.0
    %v607 = vand.u32 %v110, 4294901760
    %v608 = vsub.f32 %v110, %v607
    %v609 = vand.u32 %v608, 4294901760
    %610 = vmatpush1.xpose.msra.mxu0 %v609
    %611 = vmatprep.subr.mxu0 0.0
    %v612 = vand.u32 %v113, 4294901760
    %v613 = vsub.f32 %v113, %v612
    %v614 = vand.u32 %v613, 4294901760
    %615 = vmatpush1.xpose.msra.mxu0 %v614
    %616 = vmatprep.subr.mxu0 0.0
    %v617 = vand.u32 %v116, 4294901760
    %v618 = vsub.f32 %v116, %v617
    %v619 = vand.u32 %v618, 4294901760
    %620 = vmatpush1.xpose.msra.mxu0 %v619
    %621 = vmatprep.subr.mxu0 0.0
    %v622 = vand.u32 %v119, 4294901760
    %v623 = vsub.f32 %v119, %v622
    %v624 = vand.u32 %v623, 4294901760
    %625 = vmatpush1.xpose.msra.mxu0 %v624
    %626 = vmatprep.subr.mxu0 0.0
    %v627 = vand.u32 %v122, 4294901760
    %v628 = vsub.f32 %v122, %v627
    %v629 = vand.u32 %v628, 4294901760
    %630 = vmatpush1.xpose.msra.mxu0 %v629
    %631 = vmatprep.subr.mxu0 0.0
    %v632 = vand.u32 %v125, 4294901760
    %v633 = vsub.f32 %v125, %v632
    %v634 = vand.u32 %v633, 4294901760
    %635 = vmatpush1.xpose.msra.mxu0 %v634
    %636 = vmatprep.subr.mxu0 0.0
    %v637 = vand.u32 %v128, 4294901760
    %v638 = vsub.f32 %v128, %v637
    %v639 = vand.u32 %v638, 4294901760
    %640 = vmatpush1.xpose.msra.mxu0 %v639
    %641 = vmatprep.subr.mxu0 0.0
    %v642 = vand.u32 %v131, 4294901760
    %v643 = vsub.f32 %v131, %v642
    %v644 = vand.u32 %v643, 4294901760
    %645 = vmatpush1.xpose.msra.mxu0 %v644
    %646 = vmatprep.subr.mxu0 0.0
    %v647 = vand.u32 %v134, 4294901760
    %v648 = vsub.f32 %v134, %v647
    %v649 = vand.u32 %v648, 4294901760
    %650 = vmatpush1.xpose.msra.mxu0 %v649
    %651 = vmatprep.subr.mxu0 0.0
    %652 = vmatpush1.xpose.msra.mxu0 0.0
    %653 = vmatprep.subr.mxu0 0.0
    %654 = vmatpush1.xpose.msra.mxu0 0.0
    %655 = vmatprep.subr.mxu0 0.0
    %656 = vmatpush1.xpose.msra.mxu0 0.0
    %657 = vmatprep.subr.mxu0 0.0
    %658 = vmatpush1.xpose.msra.mxu0 0.0
    %659 = vmatprep.subr.mxu0 0.0
    %660 = vmatpush1.xpose.msra.mxu0 0.0
    %661 = vmatprep.subr.mxu0 0.0
    %662 = vmatpush1.xpose.msra.mxu0 0.0
    %663 = vmatprep.subr.mxu0 0.0
    %664 = vmatpush1.xpose.msra.mxu0 0.0
    %665 = vmatprep.subr.mxu0 0.0
    %666 = vmatpush1.xpose.msra.mxu0 0.0
    %667 = vmatprep.subr.mxu0 0.0
    %668 = vmatpush1.xpose.msra.mxu0 0.0
    %669 = vmatprep.subr.mxu0 0.0
    %670 = vmatpush1.xpose.msra.mxu0 0.0
    %671 = vmatprep.subr.mxu0 0.0
    %672 = vmatpush1.xpose.msra.mxu0 0.0
    %673 = vmatprep.subr.mxu0 0.0
    %674 = vmatpush1.xpose.msra.mxu0 0.0
    %675 = vmatprep.subr.mxu0 0.0
    %676 = vmatpush1.xpose.msra.mxu0 0.0
    %677 = vmatprep.subr.mxu0 0.0
    %678 = vmatpush1.xpose.msra.mxu0 0.0
    %679 = vmatprep.subr.mxu0 0.0
    %680 = vmatpush1.xpose.msra.mxu0 0.0
    %681 = vmatprep.subr.mxu0 0.0
    %682 = vmatpush1.xpose.msra.mxu0 0.0
    %683 = vmatprep.mubr.f32.mxu0 0.0
    %v684 = vand.u32 %v86, 4294901760
    %685 = vmatmul.mubr.f32.gmra.mrb[0].mxu0 %v684
    %v686 = vpop.f32.mrb[0].mxu0
    %v687 = vadd.f32 %v568, %v686
    %v688 = vpop.f32.mrb[0].mxu0
    %689 = vdwg.mxu0
    %690 = vmatprep.subr.mxu0 0.0
    %v691 = vand.u32 %v89, 4294901760
    %692 = vmatpush1.xpose.msra.mxu0 %v691
    %693 = vmatprep.subr.mxu0 0.0
    %v694 = vand.u32 %v92, 4294901760
    %695 = vmatpush1.xpose.msra.mxu0 %v694
    %696 = vmatprep.subr.mxu0 0.0
    %v697 = vand.u32 %v95, 4294901760
    %698 = vmatpush1.xpose.msra.mxu0 %v697
    %699 = vmatprep.subr.mxu0 0.0
    %v700 = vand.u32 %v98, 4294901760
    %701 = vmatpush1.xpose.msra.mxu0 %v700
    %702 = vmatprep.subr.mxu0 0.0
    %v703 = vand.u32 %v101, 4294901760
    %704 = vmatpush1.xpose.msra.mxu0 %v703
    %705 = vmatprep.subr.mxu0 0.0
    %v706 = vand.u32 %v104, 4294901760
    %707 = vmatpush1.xpose.msra.mxu0 %v706
    %708 = vmatprep.subr.mxu0 0.0
    %v709 = vand.u32 %v107, 4294901760
    %710 = vmatpush1.xpose.msra.mxu0 %v709
    %711 = vmatprep.subr.mxu0 0.0
    %v712 = vand.u32 %v110, 4294901760
    %713 = vmatpush1.xpose.msra.mxu0 %v712
    %714 = vmatprep.subr.mxu0 0.0
    %v715 = vand.u32 %v113, 4294901760
    %716 = vmatpush1.xpose.msra.mxu0 %v715
    %717 = vmatprep.subr.mxu0 0.0
    %v718 = vand.u32 %v116, 4294901760
    %719 = vmatpush1.xpose.msra.mxu0 %v718
    %720 = vmatprep.subr.mxu0 0.0
    %v721 = vand.u32 %v119, 4294901760
    %722 = vmatpush1.xpose.msra.mxu0 %v721
    %723 = vmatprep.subr.mxu0 0.0
    %v724 = vand.u32 %v122, 4294901760
    %725 = vmatpush1.xpose.msra.mxu0 %v724
    %726 = vmatprep.subr.mxu0 0.0
    %v727 = vand.u32 %v125, 4294901760
    %728 = vmatpush1.xpose.msra.mxu0 %v727
    %729 = vmatprep.subr.mxu0 0.0
    %v730 = vand.u32 %v128, 4294901760
    %731 = vmatpush1.xpose.msra.mxu0 %v730
    %732 = vmatprep.subr.mxu0 0.0
    %v733 = vand.u32 %v131, 4294901760
    %734 = vmatpush1.xpose.msra.mxu0 %v733
    %735 = vmatprep.subr.mxu0 0.0
    %v736 = vand.u32 %v134, 4294901760
    %737 = vmatpush1.xpose.msra.mxu0 %v736
    %738 = vmatprep.subr.mxu0 0.0
    %739 = vmatpush1.xpose.msra.mxu0 0.0
    %740 = vmatprep.subr.mxu0 0.0
    %741 = vmatpush1.xpose.msra.mxu0 0.0
    %742 = vmatprep.subr.mxu0 0.0
    %743 = vmatpush1.xpose.msra.mxu0 0.0
    %744 = vmatprep.subr.mxu0 0.0
    %745 = vmatpush1.xpose.msra.mxu0 0.0
    %746 = vmatprep.subr.mxu0 0.0
    %747 = vmatpush1.xpose.msra.mxu0 0.0
    %748 = vmatprep.subr.mxu0 0.0
    %749 = vmatpush1.xpose.msra.mxu0 0.0
    %750 = vmatprep.subr.mxu0 0.0
    %751 = vmatpush1.xpose.msra.mxu0 0.0
    %752 = vmatprep.subr.mxu0 0.0
    %753 = vmatpush1.xpose.msra.mxu0 0.0
    %754 = vmatprep.subr.mxu0 0.0
    %755 = vmatpush1.xpose.msra.mxu0 0.0
    %756 = vmatprep.subr.mxu0 0.0
    %757 = vmatpush1.xpose.msra.mxu0 0.0
    %758 = vmatprep.subr.mxu0 0.0
    %759 = vmatpush1.xpose.msra.mxu0 0.0
    %760 = vmatprep.subr.mxu0 0.0
    %761 = vmatpush1.xpose.msra.mxu0 0.0
    %762 = vmatprep.subr.mxu0 0.0
    %763 = vmatpush1.xpose.msra.mxu0 0.0
    %764 = vmatprep.subr.mxu0 0.0
    %765 = vmatpush1.xpose.msra.mxu0 0.0
    %766 = vmatprep.subr.mxu0 0.0
    %767 = vmatpush1.xpose.msra.mxu0 0.0
    %768 = vmatprep.subr.mxu0 0.0
    %769 = vmatpush1.xpose.msra.mxu0 0.0
    %770 = vmatprep.mubr.f32.mxu0 0.0
    %v771 = vand.u32 %v86, 4294901760
    %772 = vmatmul.mubr.f32.gmra.mrb[0].mxu0 %v771
    %v773 = vpop.f32.mrb[0].mxu0
    %v774 = vadd.f32 %v687, %v773
    %v775 = vpop.f32.mrb[0].mxu0
    %776 = vdwg.mxu0
    %v778 = vsel %vm84, %v51, 0
    %v781 = vsel %vm84, %v68, 0
    %v784 = vsel %vm84, %v69, 0
    %v787 = vsel %vm84, %v70, 0
    %v790 = vsel %vm84, %v71, 0
    %v793 = vsel %vm84, %v72, 0
    %v796 = vsel %vm84, %v73, 0
    %v799 = vsel %vm84, %v74, 0
    %v802 = vsel %vm84, %v75, 0
    %v805 = vsel %vm84, %v76, 0
    %v808 = vsel %vm84, %v77, 0
    %v811 = vsel %vm84, %v78, 0
    %v814 = vsel %vm84, %v79, 0
    %v817 = vsel %vm84, %v80, 0
    %v820 = vsel %vm84, %v81, 0
    %v823 = vsel %vm84, %v82, 0
    %v826 = vsel %vm84, %v83, 0
    %828 = vmatprep.subr.mxu0 0.0
    %v829 = vand.u32 %v781, 4294901760
    %830 = vmatpush1.xpose.msra.mxu0 %v829
    %831 = vmatprep.subr.mxu0 0.0
    %v832 = vand.u32 %v784, 4294901760
    %833 = vmatpush1.xpose.msra.mxu0 %v832
    %834 = vmatprep.subr.mxu0 0.0
    %v835 = vand.u32 %v787, 4294901760
    %836 = vmatpush1.xpose.msra.mxu0 %v835
    %837 = vmatprep.subr.mxu0 0.0
    %v838 = vand.u32 %v790, 4294901760
    %839 = vmatpush1.xpose.msra.mxu0 %v838
    %840 = vmatprep.subr.mxu0 0.0
    %v841 = vand.u32 %v793, 4294901760
    %842 = vmatpush1.xpose.msra.mxu0 %v841
    %843 = vmatprep.subr.mxu0 0.0
    %v844 = vand.u32 %v796, 4294901760
    %845 = vmatpush1.xpose.msra.mxu0 %v844
    %846 = vmatprep.subr.mxu0 0.0
    %v847 = vand.u32 %v799, 4294901760
    %848 = vmatpush1.xpose.msra.mxu0 %v847
    %849 = vmatprep.subr.mxu0 0.0
    %v850 = vand.u32 %v802, 4294901760
    %851 = vmatpush1.xpose.msra.mxu0 %v850
    %852 = vmatprep.subr.mxu0 0.0
    %v853 = vand.u32 %v805, 4294901760
    %854 = vmatpush1.xpose.msra.mxu0 %v853
    %855 = vmatprep.subr.mxu0 0.0
    %v856 = vand.u32 %v808, 4294901760
    %857 = vmatpush1.xpose.msra.mxu0 %v856
    %858 = vmatprep.subr.mxu0 0.0
    %v859 = vand.u32 %v811, 4294901760
    %860 = vmatpush1.xpose.msra.mxu0 %v859
    %861 = vmatprep.subr.mxu0 0.0
    %v862 = vand.u32 %v814, 4294901760
    %863 = vmatpush1.xpose.msra.mxu0 %v862
    %864 = vmatprep.subr.mxu0 0.0
    %v865 = vand.u32 %v817, 4294901760
    %866 = vmatpush1.xpose.msra.mxu0 %v865
    %867 = vmatprep.subr.mxu0 0.0
    %v868 = vand.u32 %v820, 4294901760
    %869 = vmatpush1.xpose.msra.mxu0 %v868
    %870 = vmatprep.subr.mxu0 0.0
    %v871 = vand.u32 %v823, 4294901760
    %872 = vmatpush1.xpose.msra.mxu0 %v871
    %873 = vmatprep.subr.mxu0 0.0
    %v874 = vand.u32 %v826, 4294901760
    %875 = vmatpush1.xpose.msra.mxu0 %v874
    %876 = vmatprep.subr.mxu0 0.0
    %877 = vmatpush1.xpose.msra.mxu0 0.0
    %878 = vmatprep.subr.mxu0 0.0
    %879 = vmatpush1.xpose.msra.mxu0 0.0
    %880 = vmatprep.subr.mxu0 0.0
    %881 = vmatpush1.xpose.msra.mxu0 0.0
    %882 = vmatprep.subr.mxu0 0.0
    %883 = vmatpush1.xpose.msra.mxu0 0.0
    %884 = vmatprep.subr.mxu0 0.0
    %885 = vmatpush1.xpose.msra.mxu0 0.0
    %886 = vmatprep.subr.mxu0 0.0
    %887 = vmatpush1.xpose.msra.mxu0 0.0
    %888 = vmatprep.subr.mxu0 0.0
    %889 = vmatpush1.xpose.msra.mxu0 0.0
    %890 = vmatprep.subr.mxu0 0.0
    %891 = vmatpush1.xpose.msra.mxu0 0.0
    %892 = vmatprep.subr.mxu0 0.0
    %893 = vmatpush1.xpose.msra.mxu0 0.0
    %894 = vmatprep.subr.mxu0 0.0
    %895 = vmatpush1.xpose.msra.mxu0 0.0
    %896 = vmatprep.subr.mxu0 0.0
    %897 = vmatpush1.xpose.msra.mxu0 0.0
    %898 = vmatprep.subr.mxu0 0.0
    %899 = vmatpush1.xpose.msra.mxu0 0.0
    %900 = vmatprep.subr.mxu0 0.0
    %901 = vmatpush1.xpose.msra.mxu0 0.0
    %902 = vmatprep.subr.mxu0 0.0
    %903 = vmatpush1.xpose.msra.mxu0 0.0
    %904 = vmatprep.subr.mxu0 0.0
    %905 = vmatpush1.xpose.msra.mxu0 0.0
    %906 = vmatprep.subr.mxu0 0.0
    %907 = vmatpush1.xpose.msra.mxu0 0.0
    %908 = vmatprep.mubr.f32.mxu0 0.0
    %v909 = vand.u32 %v778, 4294901760
    %v910 = vsub.f32 %v778, %v909
    %v911 = vand.u32 %v910, 4294901760
    %v912 = vsub.f32 %v910, %v911
    %v913 = vand.u32 %v912, 4294901760
    %914 = vmatmul.mubr.f32.gmra.mrb[0].mxu0 %v913
    %v915 = vpop.f32.mrb[0].mxu0
    %v916 = vadd.f32 0.0, %v915
    %v917 = vpop.f32.mrb[0].mxu0
    %918 = vdwg.mxu0
    %919 = vmatprep.subr.mxu0 0.0
    %v920 = vand.u32 %v781, 4294901760
    %v921 = vsub.f32 %v781, %v920
    %v922 = vand.u32 %v921, 4294901760
    %v923 = vsub.f32 %v921, %v922
    %v924 = vand.u32 %v923, 4294901760
    %925 = vmatpush1.xpose.msra.mxu0 %v924
    %926 = vmatprep.subr.mxu0 0.0
    %v927 = vand.u32 %v784, 4294901760
    %v928 = vsub.f32 %v784, %v927
    %v929 = vand.u32 %v928, 4294901760
    %v930 = vsub.f32 %v928, %v929
    %v931 = vand.u32 %v930, 4294901760
    %932 = vmatpush1.xpose.msra.mxu0 %v931
    %933 = vmatprep.subr.mxu0 0.0
    %v934 = vand.u32 %v787, 4294901760
    %v935 = vsub.f32 %v787, %v934
    %v936 = vand.u32 %v935, 4294901760
    %v937 = vsub.f32 %v935, %v936
    %v938 = vand.u32 %v937, 4294901760
    %939 = vmatpush1.xpose.msra.mxu0 %v938
    %940 = vmatprep.subr.mxu0 0.0
    %v941 = vand.u32 %v790, 4294901760
    %v942 = vsub.f32 %v790, %v941
    %v943 = vand.u32 %v942, 4294901760
    %v944 = vsub.f32 %v942, %v943
    %v945 = vand.u32 %v944, 4294901760
    %946 = vmatpush1.xpose.msra.mxu0 %v945
    %947 = vmatprep.subr.mxu0 0.0
    %v948 = vand.u32 %v793, 4294901760
    %v949 = vsub.f32 %v793, %v948
    %v950 = vand.u32 %v949, 4294901760
    %v951 = vsub.f32 %v949, %v950
    %v952 = vand.u32 %v951, 4294901760
    %953 = vmatpush1.xpose.msra.mxu0 %v952
    %954 = vmatprep.subr.mxu0 0.0
    %v955 = vand.u32 %v796, 4294901760
    %v956 = vsub.f32 %v796, %v955
    %v957 = vand.u32 %v956, 4294901760
    %v958 = vsub.f32 %v956, %v957
    %v959 = vand.u32 %v958, 4294901760
    %960 = vmatpush1.xpose.msra.mxu0 %v959
    %961 = vmatprep.subr.mxu0 0.0
    %v962 = vand.u32 %v799, 4294901760
    %v963 = vsub.f32 %v799, %v962
    %v964 = vand.u32 %v963, 4294901760
    %v965 = vsub.f32 %v963, %v964
    %v966 = vand.u32 %v965, 4294901760
    %967 = vmatpush1.xpose.msra.mxu0 %v966
    %968 = vmatprep.subr.mxu0 0.0
    %v969 = vand.u32 %v802, 4294901760
    %v970 = vsub.f32 %v802, %v969
    %v971 = vand.u32 %v970, 4294901760
    %v972 = vsub.f32 %v970, %v971
    %v973 = vand.u32 %v972, 4294901760
    %974 = vmatpush1.xpose.msra.mxu0 %v973
    %975 = vmatprep.subr.mxu0 0.0
    %v976 = vand.u32 %v805, 4294901760
    %v977 = vsub.f32 %v805, %v976
    %v978 = vand.u32 %v977, 4294901760
    %v979 = vsub.f32 %v977, %v978
    %v980 = vand.u32 %v979, 4294901760
    %981 = vmatpush1.xpose.msra.mxu0 %v980
    %982 = vmatprep.subr.mxu0 0.0
    %v983 = vand.u32 %v808, 4294901760
    %v984 = vsub.f32 %v808, %v983
    %v985 = vand.u32 %v984, 4294901760
    %v986 = vsub.f32 %v984, %v985
    %v987 = vand.u32 %v986, 4294901760
    %988 = vmatpush1.xpose.msra.mxu0 %v987
    %989 = vmatprep.subr.mxu0 0.0
    %v990 = vand.u32 %v811, 4294901760
    %v991 = vsub.f32 %v811, %v990
    %v992 = vand.u32 %v991, 4294901760
    %v993 = vsub.f32 %v991, %v992
    %v994 = vand.u32 %v993, 4294901760
    %995 = vmatpush1.xpose.msra.mxu0 %v994
    %996 = vmatprep.subr.mxu0 0.0
    %v997 = vand.u32 %v814, 4294901760
    %v998 = vsub.f32 %v814, %v997
    %v999 = vand.u32 %v998, 4294901760
    %v1000 = vsub.f32 %v998, %v999
    %v1001 = vand.u32 %v1000, 4294901760
    %1002 = vmatpush1.xpose.msra.mxu0 %v1001
    %1003 = vmatprep.subr.mxu0 0.0
    %v1004 = vand.u32 %v817, 4294901760
    %v1005 = vsub.f32 %v817, %v1004
    %v1006 = vand.u32 %v1005, 4294901760
    %v1007 = vsub.f32 %v1005, %v1006
    %v1008 = vand.u32 %v1007, 4294901760
    %1009 = vmatpush1.xpose.msra.mxu0 %v1008
    %1010 = vmatprep.subr.mxu0 0.0
    %v1011 = vand.u32 %v820, 4294901760
    %v1012 = vsub.f32 %v820, %v1011
    %v1013 = vand.u32 %v1012, 4294901760
    %v1014 = vsub.f32 %v1012, %v1013
    %v1015 = vand.u32 %v1014, 4294901760
    %1016 = vmatpush1.xpose.msra.mxu0 %v1015
    %1017 = vmatprep.subr.mxu0 0.0
    %v1018 = vand.u32 %v823, 4294901760
    %v1019 = vsub.f32 %v823, %v1018
    %v1020 = vand.u32 %v1019, 4294901760
    %v1021 = vsub.f32 %v1019, %v1020
    %v1022 = vand.u32 %v1021, 4294901760
    %1023 = vmatpush1.xpose.msra.mxu0 %v1022
    %1024 = vmatprep.subr.mxu0 0.0
    %v1025 = vand.u32 %v826, 4294901760
    %v1026 = vsub.f32 %v826, %v1025
    %v1027 = vand.u32 %v1026, 4294901760
    %v1028 = vsub.f32 %v1026, %v1027
    %v1029 = vand.u32 %v1028, 4294901760
    %1030 = vmatpush1.xpose.msra.mxu0 %v1029
    %1031 = vmatprep.subr.mxu0 0.0
    %1032 = vmatpush1.xpose.msra.mxu0 0.0
    %1033 = vmatprep.subr.mxu0 0.0
    %1034 = vmatpush1.xpose.msra.mxu0 0.0
    %1035 = vmatprep.subr.mxu0 0.0
    %1036 = vmatpush1.xpose.msra.mxu0 0.0
    %1037 = vmatprep.subr.mxu0 0.0
    %1038 = vmatpush1.xpose.msra.mxu0 0.0
    %1039 = vmatprep.subr.mxu0 0.0
    %1040 = vmatpush1.xpose.msra.mxu0 0.0
    %1041 = vmatprep.subr.mxu0 0.0
    %1042 = vmatpush1.xpose.msra.mxu0 0.0
    %1043 = vmatprep.subr.mxu0 0.0
    %1044 = vmatpush1.xpose.msra.mxu0 0.0
    %1045 = vmatprep.subr.mxu0 0.0
    %1046 = vmatpush1.xpose.msra.mxu0 0.0
    %1047 = vmatprep.subr.mxu0 0.0
    %1048 = vmatpush1.xpose.msra.mxu0 0.0
    %1049 = vmatprep.subr.mxu0 0.0
    %1050 = vmatpush1.xpose.msra.mxu0 0.0
    %1051 = vmatprep.subr.mxu0 0.0
    %1052 = vmatpush1.xpose.msra.mxu0 0.0
    %1053 = vmatprep.subr.mxu0 0.0
    %1054 = vmatpush1.xpose.msra.mxu0 0.0
    %1055 = vmatprep.subr.mxu0 0.0
    %1056 = vmatpush1.xpose.msra.mxu0 0.0
    %1057 = vmatprep.subr.mxu0 0.0
    %1058 = vmatpush1.xpose.msra.mxu0 0.0
    %1059 = vmatprep.subr.mxu0 0.0
    %1060 = vmatpush1.xpose.msra.mxu0 0.0
    %1061 = vmatprep.subr.mxu0 0.0
    %1062 = vmatpush1.xpose.msra.mxu0 0.0
    %1063 = vmatprep.mubr.f32.mxu0 0.0
    %v1064 = vand.u32 %v778, 4294901760
    %1065 = vmatmul.mubr.f32.gmra.mrb[0].mxu0 %v1064
    %v1066 = vpop.f32.mrb[0].mxu0
    %v1067 = vadd.f32 %v916, %v1066
    %v1068 = vpop.f32.mrb[0].mxu0
    %1069 = vdwg.mxu0
    %1070 = vmatprep.subr.mxu0 0.0
    %v1071 = vand.u32 %v781, 4294901760
    %v1072 = vsub.f32 %v781, %v1071
    %1073 = vmatpush1.xpose.msra.mxu0 %v1072
    %1074 = vmatprep.subr.mxu0 0.0
    %v1075 = vand.u32 %v784, 4294901760
    %v1076 = vsub.f32 %v784, %v1075
    %1077 = vmatpush1.xpose.msra.mxu0 %v1076
    %1078 = vmatprep.subr.mxu0 0.0
    %v1079 = vand.u32 %v787, 4294901760
    %v1080 = vsub.f32 %v787, %v1079
    %1081 = vmatpush1.xpose.msra.mxu0 %v1080
    %1082 = vmatprep.subr.mxu0 0.0
    %v1083 = vand.u32 %v790, 4294901760
    %v1084 = vsub.f32 %v790, %v1083
    %1085 = vmatpush1.xpose.msra.mxu0 %v1084
    %1086 = vmatprep.subr.mxu0 0.0
    %v1087 = vand.u32 %v793, 4294901760
    %v1088 = vsub.f32 %v793, %v1087
    %1089 = vmatpush1.xpose.msra.mxu0 %v1088
    %1090 = vmatprep.subr.mxu0 0.0
    %v1091 = vand.u32 %v796, 4294901760
    %v1092 = vsub.f32 %v796, %v1091
    %1093 = vmatpush1.xpose.msra.mxu0 %v1092
    %1094 = vmatprep.subr.mxu0 0.0
    %v1095 = vand.u32 %v799, 4294901760
    %v1096 = vsub.f32 %v799, %v1095
    %1097 = vmatpush1.xpose.msra.mxu0 %v1096
    %1098 = vmatprep.subr.mxu0 0.0
    %v1099 = vand.u32 %v802, 4294901760
    %v1100 = vsub.f32 %v802, %v1099
    %1101 = vmatpush1.xpose.msra.mxu0 %v1100
    %1102 = vmatprep.subr.mxu0 0.0
    %v1103 = vand.u32 %v805, 4294901760
    %v1104 = vsub.f32 %v805, %v1103
    %1105 = vmatpush1.xpose.msra.mxu0 %v1104
    %1106 = vmatprep.subr.mxu0 0.0
    %v1107 = vand.u32 %v808, 4294901760
    %v1108 = vsub.f32 %v808, %v1107
    %1109 = vmatpush1.xpose.msra.mxu0 %v1108
    %1110 = vmatprep.subr.mxu0 0.0
    %v1111 = vand.u32 %v811, 4294901760
    %v1112 = vsub.f32 %v811, %v1111
    %1113 = vmatpush1.xpose.msra.mxu0 %v1112
    %1114 = vmatprep.subr.mxu0 0.0
    %v1115 = vand.u32 %v814, 4294901760
    %v1116 = vsub.f32 %v814, %v1115
    %1117 = vmatpush1.xpose.msra.mxu0 %v1116
    %1118 = vmatprep.subr.mxu0 0.0
    %v1119 = vand.u32 %v817, 4294901760
    %v1120 = vsub.f32 %v817, %v1119
    %1121 = vmatpush1.xpose.msra.mxu0 %v1120
    %1122 = vmatprep.subr.mxu0 0.0
    %v1123 = vand.u32 %v820, 4294901760
    %v1124 = vsub.f32 %v820, %v1123
    %1125 = vmatpush1.xpose.msra.mxu0 %v1124
    %1126 = vmatprep.subr.mxu0 0.0
    %v1127 = vand.u32 %v823, 4294901760
    %v1128 = vsub.f32 %v823, %v1127
    %1129 = vmatpush1.xpose.msra.mxu0 %v1128
    %1130 = vmatprep.subr.mxu0 0.0
    %v1131 = vand.u32 %v826, 4294901760
    %v1132 = vsub.f32 %v826, %v1131
    %1133 = vmatpush1.xpose.msra.mxu0 %v1132
    %1134 = vmatprep.subr.mxu0 0.0
    %1135 = vmatpush1.xpose.msra.mxu0 0.0
    %1136 = vmatprep.subr.mxu0 0.0
    %1137 = vmatpush1.xpose.msra.mxu0 0.0
    %1138 = vmatprep.subr.mxu0 0.0
    %1139 = vmatpush1.xpose.msra.mxu0 0.0
    %1140 = vmatprep.subr.mxu0 0.0
    %1141 = vmatpush1.xpose.msra.mxu0 0.0
    %1142 = vmatprep.subr.mxu0 0.0
    %1143 = vmatpush1.xpose.msra.mxu0 0.0
    %1144 = vmatprep.subr.mxu0 0.0
    %1145 = vmatpush1.xpose.msra.mxu0 0.0
    %1146 = vmatprep.subr.mxu0 0.0
    %1147 = vmatpush1.xpose.msra.mxu0 0.0
    %1148 = vmatprep.subr.mxu0 0.0
    %1149 = vmatpush1.xpose.msra.mxu0 0.0
    %1150 = vmatprep.subr.mxu0 0.0
    %1151 = vmatpush1.xpose.msra.mxu0 0.0
    %1152 = vmatprep.subr.mxu0 0.0
    %1153 = vmatpush1.xpose.msra.mxu0 0.0
    %1154 = vmatprep.subr.mxu0 0.0
    %1155 = vmatpush1.xpose.msra.mxu0 0.0
    %1156 = vmatprep.subr.mxu0 0.0
    %1157 = vmatpush1.xpose.msra.mxu0 0.0
    %1158 = vmatprep.subr.mxu0 0.0
    %1159 = vmatpush1.xpose.msra.mxu0 0.0
    %1160 = vmatprep.subr.mxu0 0.0
    %1161 = vmatpush1.xpose.msra.mxu0 0.0
    %1162 = vmatprep.subr.mxu0 0.0
    %1163 = vmatpush1.xpose.msra.mxu0 0.0
    %1164 = vmatprep.subr.mxu0 0.0
    %1165 = vmatpush1.xpose.msra.mxu0 0.0
    %1166 = vmatprep.mubr.f32.mxu0 0.0
    %v1167 = vand.u32 %v778, 4294901760
    %v1168 = vsub.f32 %v778, %v1167
    %1169 = vmatmul.mubr.f32.gmra.mrb[0].mxu0 %v1168
    %v1170 = vpop.f32.mrb[0].mxu0
    %v1171 = vadd.f32 %v1067, %v1170
    %v1172 = vpop.f32.mrb[0].mxu0
    %1173 = vdwg.mxu0
    %1174 = vmatprep.subr.mxu0 0.0
    %v1175 = vand.u32 %v781, 4294901760
    %1176 = vmatpush1.xpose.msra.mxu0 %v1175
    %1177 = vmatprep.subr.mxu0 0.0
    %v1178 = vand.u32 %v784, 4294901760
    %1179 = vmatpush1.xpose.msra.mxu0 %v1178
    %1180 = vmatprep.subr.mxu0 0.0
    %v1181 = vand.u32 %v787, 4294901760
    %1182 = vmatpush1.xpose.msra.mxu0 %v1181
    %1183 = vmatprep.subr.mxu0 0.0
    %v1184 = vand.u32 %v790, 4294901760
    %1185 = vmatpush1.xpose.msra.mxu0 %v1184
    %1186 = vmatprep.subr.mxu0 0.0
    %v1187 = vand.u32 %v793, 4294901760
    %1188 = vmatpush1.xpose.msra.mxu0 %v1187
    %1189 = vmatprep.subr.mxu0 0.0
    %v1190 = vand.u32 %v796, 4294901760
    %1191 = vmatpush1.xpose.msra.mxu0 %v1190
    %1192 = vmatprep.subr.mxu0 0.0
    %v1193 = vand.u32 %v799, 4294901760
    %1194 = vmatpush1.xpose.msra.mxu0 %v1193
    %1195 = vmatprep.subr.mxu0 0.0
    %v1196 = vand.u32 %v802, 4294901760
    %1197 = vmatpush1.xpose.msra.mxu0 %v1196
    %1198 = vmatprep.subr.mxu0 0.0
    %v1199 = vand.u32 %v805, 4294901760
    %1200 = vmatpush1.xpose.msra.mxu0 %v1199
    %1201 = vmatprep.subr.mxu0 0.0
    %v1202 = vand.u32 %v808, 4294901760
    %1203 = vmatpush1.xpose.msra.mxu0 %v1202
    %1204 = vmatprep.subr.mxu0 0.0
    %v1205 = vand.u32 %v811, 4294901760
    %1206 = vmatpush1.xpose.msra.mxu0 %v1205
    %1207 = vmatprep.subr.mxu0 0.0
    %v1208 = vand.u32 %v814, 4294901760
    %1209 = vmatpush1.xpose.msra.mxu0 %v1208
    %1210 = vmatprep.subr.mxu0 0.0
    %v1211 = vand.u32 %v817, 4294901760
    %1212 = vmatpush1.xpose.msra.mxu0 %v1211
    %1213 = vmatprep.subr.mxu0 0.0
    %v1214 = vand.u32 %v820, 4294901760
    %1215 = vmatpush1.xpose.msra.mxu0 %v1214
    %1216 = vmatprep.subr.mxu0 0.0
    %v1217 = vand.u32 %v823, 4294901760
    %1218 = vmatpush1.xpose.msra.mxu0 %v1217
    %1219 = vmatprep.subr.mxu0 0.0
    %v1220 = vand.u32 %v826, 4294901760
    %1221 = vmatpush1.xpose.msra.mxu0 %v1220
    %1222 = vmatprep.subr.mxu0 0.0
    %1223 = vmatpush1.xpose.msra.mxu0 0.0
    %1224 = vmatprep.subr.mxu0 0.0
    %1225 = vmatpush1.xpose.msra.mxu0 0.0
    %1226 = vmatprep.subr.mxu0 0.0
    %1227 = vmatpush1.xpose.msra.mxu0 0.0
    %1228 = vmatprep.subr.mxu0 0.0
    %1229 = vmatpush1.xpose.msra.mxu0 0.0
    %1230 = vmatprep.subr.mxu0 0.0
    %1231 = vmatpush1.xpose.msra.mxu0 0.0
    %1232 = vmatprep.subr.mxu0 0.0
    %1233 = vmatpush1.xpose.msra.mxu0 0.0
    %1234 = vmatprep.subr.mxu0 0.0
    %1235 = vmatpush1.xpose.msra.mxu0 0.0
    %1236 = vmatprep.subr.mxu0 0.0
    %1237 = vmatpush1.xpose.msra.mxu0 0.0
    %1238 = vmatprep.subr.mxu0 0.0
    %1239 = vmatpush1.xpose.msra.mxu0 0.0
    %1240 = vmatprep.subr.mxu0 0.0
    %1241 = vmatpush1.xpose.msra.mxu0 0.0
    %1242 = vmatprep.subr.mxu0 0.0
    %1243 = vmatpush1.xpose.msra.mxu0 0.0
    %1244 = vmatprep.subr.mxu0 0.0
    %1245 = vmatpush1.xpose.msra.mxu0 0.0
    %1246 = vmatprep.subr.mxu0 0.0
    %1247 = vmatpush1.xpose.msra.mxu0 0.0
    %1248 = vmatprep.subr.mxu0 0.0
    %1249 = vmatpush1.xpose.msra.mxu0 0.0
    %1250 = vmatprep.subr.mxu0 0.0
    %1251 = vmatpush1.xpose.msra.mxu0 0.0
    %1252 = vmatprep.subr.mxu0 0.0
    %1253 = vmatpush1.xpose.msra.mxu0 0.0
    %1254 = vmatprep.mubr.f32.mxu0 0.0
    %v1255 = vand.u32 %v778, 4294901760
    %v1256 = vsub.f32 %v778, %v1255
    %v1257 = vand.u32 %v1256, 4294901760
    %1258 = vmatmul.mubr.f32.gmra.mrb[0].mxu0 %v1257
    %v1259 = vpop.f32.mrb[0].mxu0
    %v1260 = vadd.f32 %v1171, %v1259
    %v1261 = vpop.f32.mrb[0].mxu0
    %1262 = vdwg.mxu0
    %1263 = vmatprep.subr.mxu0 0.0
    %v1264 = vand.u32 %v781, 4294901760
    %v1265 = vsub.f32 %v781, %v1264
    %v1266 = vand.u32 %v1265, 4294901760
    %1267 = vmatpush1.xpose.msra.mxu0 %v1266
    %1268 = vmatprep.subr.mxu0 0.0
    %v1269 = vand.u32 %v784, 4294901760
    %v1270 = vsub.f32 %v784, %v1269
    %v1271 = vand.u32 %v1270, 4294901760
    %1272 = vmatpush1.xpose.msra.mxu0 %v1271
    %1273 = vmatprep.subr.mxu0 0.0
    %v1274 = vand.u32 %v787, 4294901760
    %v1275 = vsub.f32 %v787, %v1274
    %v1276 = vand.u32 %v1275, 4294901760
    %1277 = vmatpush1.xpose.msra.mxu0 %v1276
    %1278 = vmatprep.subr.mxu0 0.0
    %v1279 = vand.u32 %v790, 4294901760
    %v1280 = vsub.f32 %v790, %v1279
    %v1281 = vand.u32 %v1280, 4294901760
    %1282 = vmatpush1.xpose.msra.mxu0 %v1281
    %1283 = vmatprep.subr.mxu0 0.0
    %v1284 = vand.u32 %v793, 4294901760
    %v1285 = vsub.f32 %v793, %v1284
    %v1286 = vand.u32 %v1285, 4294901760
    %1287 = vmatpush1.xpose.msra.mxu0 %v1286
    %1288 = vmatprep.subr.mxu0 0.0
    %v1289 = vand.u32 %v796, 4294901760
    %v1290 = vsub.f32 %v796, %v1289
    %v1291 = vand.u32 %v1290, 4294901760
    %1292 = vmatpush1.xpose.msra.mxu0 %v1291
    %1293 = vmatprep.subr.mxu0 0.0
    %v1294 = vand.u32 %v799, 4294901760
    %v1295 = vsub.f32 %v799, %v1294
    %v1296 = vand.u32 %v1295, 4294901760
    %1297 = vmatpush1.xpose.msra.mxu0 %v1296
    %1298 = vmatprep.subr.mxu0 0.0
    %v1299 = vand.u32 %v802, 4294901760
    %v1300 = vsub.f32 %v802, %v1299
    %v1301 = vand.u32 %v1300, 4294901760
    %1302 = vmatpush1.xpose.msra.mxu0 %v1301
    %1303 = vmatprep.subr.mxu0 0.0
    %v1304 = vand.u32 %v805, 4294901760
    %v1305 = vsub.f32 %v805, %v1304
    %v1306 = vand.u32 %v1305, 4294901760
    %1307 = vmatpush1.xpose.msra.mxu0 %v1306
    %1308 = vmatprep.subr.mxu0 0.0
    %v1309 = vand.u32 %v808, 4294901760
    %v1310 = vsub.f32 %v808, %v1309
    %v1311 = vand.u32 %v1310, 4294901760
    %1312 = vmatpush1.xpose.msra.mxu0 %v1311
    %1313 = vmatprep.subr.mxu0 0.0
    %v1314 = vand.u32 %v811, 4294901760
    %v1315 = vsub.f32 %v811, %v1314
    %v1316 = vand.u32 %v1315, 4294901760
    %1317 = vmatpush1.xpose.msra.mxu0 %v1316
    %1318 = vmatprep.subr.mxu0 0.0
    %v1319 = vand.u32 %v814, 4294901760
    %v1320 = vsub.f32 %v814, %v1319
    %v1321 = vand.u32 %v1320, 4294901760
    %1322 = vmatpush1.xpose.msra.mxu0 %v1321
    %1323 = vmatprep.subr.mxu0 0.0
    %v1324 = vand.u32 %v817, 4294901760
    %v1325 = vsub.f32 %v817, %v1324
    %v1326 = vand.u32 %v1325, 4294901760
    %1327 = vmatpush1.xpose.msra.mxu0 %v1326
    %1328 = vmatprep.subr.mxu0 0.0
    %v1329 = vand.u32 %v820, 4294901760
    %v1330 = vsub.f32 %v820, %v1329
    %v1331 = vand.u32 %v1330, 4294901760
    %1332 = vmatpush1.xpose.msra.mxu0 %v1331
    %1333 = vmatprep.subr.mxu0 0.0
    %v1334 = vand.u32 %v823, 4294901760
    %v1335 = vsub.f32 %v823, %v1334
    %v1336 = vand.u32 %v1335, 4294901760
    %1337 = vmatpush1.xpose.msra.mxu0 %v1336
    %1338 = vmatprep.subr.mxu0 0.0
    %v1339 = vand.u32 %v826, 4294901760
    %v1340 = vsub.f32 %v826, %v1339
    %v1341 = vand.u32 %v1340, 4294901760
    %1342 = vmatpush1.xpose.msra.mxu0 %v1341
    %1343 = vmatprep.subr.mxu0 0.0
    %1344 = vmatpush1.xpose.msra.mxu0 0.0
    %1345 = vmatprep.subr.mxu0 0.0
    %1346 = vmatpush1.xpose.msra.mxu0 0.0
    %1347 = vmatprep.subr.mxu0 0.0
    %1348 = vmatpush1.xpose.msra.mxu0 0.0
    %1349 = vmatprep.subr.mxu0 0.0
    %1350 = vmatpush1.xpose.msra.mxu0 0.0
    %1351 = vmatprep.subr.mxu0 0.0
    %1352 = vmatpush1.xpose.msra.mxu0 0.0
    %1353 = vmatprep.subr.mxu0 0.0
    %1354 = vmatpush1.xpose.msra.mxu0 0.0
    %1355 = vmatprep.subr.mxu0 0.0
    %1356 = vmatpush1.xpose.msra.mxu0 0.0
    %1357 = vmatprep.subr.mxu0 0.0
    %1358 = vmatpush1.xpose.msra.mxu0 0.0
    %1359 = vmatprep.subr.mxu0 0.0
    %1360 = vmatpush1.xpose.msra.mxu0 0.0
    %1361 = vmatprep.subr.mxu0 0.0
    %1362 = vmatpush1.xpose.msra.mxu0 0.0
    %1363 = vmatprep.subr.mxu0 0.0
    %1364 = vmatpush1.xpose.msra.mxu0 0.0
    %1365 = vmatprep.subr.mxu0 0.0
    %1366 = vmatpush1.xpose.msra.mxu0 0.0
    %1367 = vmatprep.subr.mxu0 0.0
    %1368 = vmatpush1.xpose.msra.mxu0 0.0
    %1369 = vmatprep.subr.mxu0 0.0
    %1370 = vmatpush1.xpose.msra.mxu0 0.0
    %1371 = vmatprep.subr.mxu0 0.0
    %1372 = vmatpush1.xpose.msra.mxu0 0.0
    %1373 = vmatprep.subr.mxu0 0.0
    %1374 = vmatpush1.xpose.msra.mxu0 0.0
    %1375 = vmatprep.mubr.f32.mxu0 0.0
    %v1376 = vand.u32 %v778, 4294901760
    %1377 = vmatmul.mubr.f32.gmra.mrb[0].mxu0 %v1376
    %v1378 = vpop.f32.mrb[0].mxu0
    %v1379 = vadd.f32 %v1260, %v1378
    %v1380 = vpop.f32.mrb[0].mxu0
    %1381 = vdwg.mxu0
    %1382 = vmatprep.subr.mxu0 0.0
    %v1383 = vand.u32 %v781, 4294901760
    %1384 = vmatpush1.xpose.msra.mxu0 %v1383
    %1385 = vmatprep.subr.mxu0 0.0
    %v1386 = vand.u32 %v784, 4294901760
    %1387 = vmatpush1.xpose.msra.mxu0 %v1386
    %1388 = vmatprep.subr.mxu0 0.0
    %v1389 = vand.u32 %v787, 4294901760
    %1390 = vmatpush1.xpose.msra.mxu0 %v1389
    %1391 = vmatprep.subr.mxu0 0.0
    %v1392 = vand.u32 %v790, 4294901760
    %1393 = vmatpush1.xpose.msra.mxu0 %v1392
    %1394 = vmatprep.subr.mxu0 0.0
    %v1395 = vand.u32 %v793, 4294901760
    %1396 = vmatpush1.xpose.msra.mxu0 %v1395
    %1397 = vmatprep.subr.mxu0 0.0
    %v1398 = vand.u32 %v796, 4294901760
    %1399 = vmatpush1.xpose.msra.mxu0 %v1398
    %1400 = vmatprep.subr.mxu0 0.0
    %v1401 = vand.u32 %v799, 4294901760
    %1402 = vmatpush1.xpose.msra.mxu0 %v1401
    %1403 = vmatprep.subr.mxu0 0.0
    %v1404 = vand.u32 %v802, 4294901760
    %1405 = vmatpush1.xpose.msra.mxu0 %v1404
    %1406 = vmatprep.subr.mxu0 0.0
    %v1407 = vand.u32 %v805, 4294901760
    %1408 = vmatpush1.xpose.msra.mxu0 %v1407
    %1409 = vmatprep.subr.mxu0 0.0
    %v1410 = vand.u32 %v808, 4294901760
    %1411 = vmatpush1.xpose.msra.mxu0 %v1410
    %1412 = vmatprep.subr.mxu0 0.0
    %v1413 = vand.u32 %v811, 4294901760
    %1414 = vmatpush1.xpose.msra.mxu0 %v1413
    %1415 = vmatprep.subr.mxu0 0.0
    %v1416 = vand.u32 %v814, 4294901760
    %1417 = vmatpush1.xpose.msra.mxu0 %v1416
    %1418 = vmatprep.subr.mxu0 0.0
    %v1419 = vand.u32 %v817, 4294901760
    %1420 = vmatpush1.xpose.msra.mxu0 %v1419
    %1421 = vmatprep.subr.mxu0 0.0
    %v1422 = vand.u32 %v820, 4294901760
    %1423 = vmatpush1.xpose.msra.mxu0 %v1422
    %1424 = vmatprep.subr.mxu0 0.0
    %v1425 = vand.u32 %v823, 4294901760
    %1426 = vmatpush1.xpose.msra.mxu0 %v1425
    %1427 = vmatprep.subr.mxu0 0.0
    %v1428 = vand.u32 %v826, 4294901760
    %1429 = vmatpush1.xpose.msra.mxu0 %v1428
    %1430 = vmatprep.subr.mxu0 0.0
    %1431 = vmatpush1.xpose.msra.mxu0 0.0
    %1432 = vmatprep.subr.mxu0 0.0
    %1433 = vmatpush1.xpose.msra.mxu0 0.0
    %1434 = vmatprep.subr.mxu0 0.0
    %1435 = vmatpush1.xpose.msra.mxu0 0.0
    %1436 = vmatprep.subr.mxu0 0.0
    %1437 = vmatpush1.xpose.msra.mxu0 0.0
    %1438 = vmatprep.subr.mxu0 0.0
    %1439 = vmatpush1.xpose.msra.mxu0 0.0
    %1440 = vmatprep.subr.mxu0 0.0
    %1441 = vmatpush1.xpose.msra.mxu0 0.0
    %1442 = vmatprep.subr.mxu0 0.0
    %1443 = vmatpush1.xpose.msra.mxu0 0.0
    %1444 = vmatprep.subr.mxu0 0.0
    %1445 = vmatpush1.xpose.msra.mxu0 0.0
    %1446 = vmatprep.subr.mxu0 0.0
    %1447 = vmatpush1.xpose.msra.mxu0 0.0
    %1448 = vmatprep.subr.mxu0 0.0
    %1449 = vmatpush1.xpose.msra.mxu0 0.0
    %1450 = vmatprep.subr.mxu0 0.0
    %1451 = vmatpush1.xpose.msra.mxu0 0.0
    %1452 = vmatprep.subr.mxu0 0.0
    %1453 = vmatpush1.xpose.msra.mxu0 0.0
    %1454 = vmatprep.subr.mxu0 0.0
    %1455 = vmatpush1.xpose.msra.mxu0 0.0
    %1456 = vmatprep.subr.mxu0 0.0
    %1457 = vmatpush1.xpose.msra.mxu0 0.0
    %1458 = vmatprep.subr.mxu0 0.0
    %1459 = vmatpush1.xpose.msra.mxu0 0.0
    %1460 = vmatprep.subr.mxu0 0.0
    %1461 = vmatpush1.xpose.msra.mxu0 0.0
    %1462 = vmatprep.mubr.f32.mxu0 0.0
    %v1463 = vand.u32 %v778, 4294901760
    %1464 = vmatmul.mubr.f32.gmra.mrb[0].mxu0 %v1463
    %v1465 = vpop.f32.mrb[0].mxu0
    %v1466 = vadd.f32 %v1379, %v1465
    %v1467 = vpop.f32.mrb[0].mxu0
    %1468 = vdwg.mxu0
    %v1469 = vmul.f32 %v774, 0.17677669
    %v1470 = vmul.f32 %v1466, 0.17677669
    %v1471 = vlaneseq
    %v1472 = vand.u32 %v1471, 127
    %vm1473 = vcmp.lt.s32.totalorder %v1472, 8
    %v1474 = vsel %vm1473, %v1469, -inf
    %v1475 = vsel %vm1473, %v1470, -inf
    %1476 = vmax.xlane.f32.xlu0 %v1474
    %v1477 = vpop.xlane.xlu0 %1476
    %1478 = vmax.xlane.f32.xlu0 %v1475
    %v1479 = vpop.xlane.xlu0 %1478
    %v1480 = vsub.f32 %v1474, %v1477
    %v1481 = vsub.f32 %v1475, %v1479
    %v1482 = vmul.f32 %v1480, 1.442695
    %v1483 = vpow.pop %v1482
    %v1484 = vmul.f32 %v1481, 1.442695
    %v1485 = vpow.pop %v1484
    %1486 = vadd.xlane.f32.xlu0 %v1483
    %v1487 = vpop.xlane.xlu0 %1486
    %1488 = vadd.xlane.f32.xlu0 %v1485
    %v1489 = vpop.xlane.xlu0 %1488
    %v1490 = vrcp.pop %v1487
    %v1491 = vrcp.pop %v1489
    %v1492 = vmul.f32 %v1483, %v1490
    %v1493 = vmul.f32 %v1485, %v1491
    %1494 = vst [vmem:[#allocation3] sm:$0xff] %v1492
    %1495 = vst [vmem:[#allocation3 + $0x8] sm:$0xff] %v1493
    // Predicated region
    $region48: #{tpu_custom_call.1} parent=1 // pred_check
      _
    $region49: #{tpu_custom_call.1} parent=1 // pred_check_branch
      %1497 = sbr.rel (0) target = $region51
    $region50: #{tpu_custom_call.1} parent=1 // pred_region
      %s1499 = ssub.s32 256, 256
      %1500 = vsyncadd [#allocation4], %s1499
      %s1501 = sshll.u32 [#allocation3], 4
      %s1502 = int_to_ptr.vmem [resolvable:$true] %s1501
      %1507 = dma.vmem_to_hbm [thread:$0]  %s1502, 256, %s2, [#allocation4], 128, 128, 8
    $region51: #{tpu_custom_call.1} parent=1 // pred_fallthru
      _
    // Predicated region
    $region52: #{tpu_custom_call.1} parent=1 // pred_check
      _
    $region53: #{tpu_custom_call.1} parent=1 // pred_check_branch
      %1509 = sbr.rel (0) target = $region55
    $region54: #{tpu_custom_call.1} parent=1 // pred_region
      %1510 = dma.done [#allocation4], 256
    $region55: #{tpu_custom_call.1} parent=1 // pred_fallthru
      _
    %1511 = vsyncpa [#allocation4], 1

// kernel: tpu_custom_call.1
$region0: #{tpu_custom_call.1}
  #allocation0 [shape = 'u32[]', space=smem, size = 0x4, offset = 0x4, fixed_abs, tag = 'smem constant byte address 0x4 - core index']
  #allocation1 [shape = 'u32[144,128]{1,0:T(1,128)}', space=vmem, size = 0x12000, scoped, tag = 'internal scratch']
  %s0 = inlined_call_operand.vmem [shape: f32[2,128,32], index: 0, kind: input, shape index: {}]
  %s1 = inlined_call_operand.vmem [shape: f32[2,128,32], index: 1, kind: input, shape index: {}]
  %s2 = inlined_call_operand.hbm [shape: f32[2,8,128], index: 2, kind: output, shape index: {}]
  %s3 = sld [smem:[#allocation0]]
  $region56: #{tpu_custom_call.1} parent=0
    _
  %s5 = ssub.s32 1, %s3
  %s6 = scalar_select 0, %s5, %s3
  $region1: #{tpu_custom_call.1} parent=0
    #allocation2 [shape = 'u8[8192]{0}', space=vmem, size = 0x2000, scoped, tag = 'input window, operand 0, single buffered']
    #allocation3 [shape = 'u8[8192]{0}', space=vmem, size = 0x2000, scoped, tag = 'output window, operand 0, single buffered']
    #allocation4 [shape = 's32[1]{0}', space=sflag, size = 0x4, scoped, tag = 'scoped memory for tpu_custom_call.1']
    %7 = vsyncpa [#allocation4], 0
    // Predicated region
    $region2: #{tpu_custom_call.1} parent=1 // pred_check
      _
    $region3: #{tpu_custom_call.1} parent=1 // pred_check_branch
      %9 = sbr.rel (0) target = $region5
    $region4: #{tpu_custom_call.1} parent=1 // pred_region
      // Predicated region
      $region6: #{tpu_custom_call.1} parent=4 // pred_check
        _
      $region7: #{tpu_custom_call.1} parent=4 // pred_check_branch
        %11 = sbr.rel (0) target = $region9
      $region8: #{tpu_custom_call.1} parent=4 // pred_region
        // Predicated region
        $region10: #{tpu_custom_call.1} parent=8 // pred_check
          _
        $region11: #{tpu_custom_call.1} parent=8 // pred_check_branch
          %13 = sbr.rel (0) target = $region13
        $region12: #{tpu_custom_call.1} parent=8 // pred_region
          // Predicated region
          $region25: #{tpu_custom_call.1} parent=12 // pred_check
            _
          $region26: #{tpu_custom_call.1} parent=12 // pred_check_branch
            %30 = sbr.rel (0) target = $region28
          $region27: #{tpu_custom_call.1} parent=12 // pred_region
            loop: start=0, step=1, limit=1
            $region29: #{tpu_custom_call.1} parent=27 // loop_pre_header
              _
            $region30: #{tpu_custom_call.1} parent=27 // loop_header
              %s32 = sphi 0, %s36
              %p33 = scmp.ge.s32.totalorder %s32, 1
              %s37 = sphi %s0, %s0
              %s38 = sphi [#allocation2], [#allocation2]
            $region31: #{tpu_custom_call.1} parent=27 // loop_header_branch
              %35 = sbr.rel (%p33) target = $region35
            $region32: #{tpu_custom_call.1} parent=27 // loop_body
              %v39 = vld [vmem:[%s37] sm:$0xff]
              %40 = vst [vmem:[%s38] sm:$0xff] %v39
              %v41 = vld [vmem:[%s37 + $0x80] sm:$0xff]
              %42 = vst [vmem:[%s38 + $0x8] sm:$0xff] %v41
            $region33: #{tpu_custom_call.1} parent=27 // loop_footer
              %s36 = sadd.s32 1, %s32
            $region34: #{tpu_custom_call.1} parent=27 // loop_footer_branch
              %31 = sbr.rel target = $region30
            $region35: #{tpu_custom_call.1} parent=27 // loop_exit
              _
          $region28: #{tpu_custom_call.1} parent=12 // pred_fallthru
            _
          // Predicated region
          $region36: #{tpu_custom_call.1} parent=12 // pred_check
            _
          $region37: #{tpu_custom_call.1} parent=12 // pred_check_branch
            %44 = sbr.rel target = $region39
          $region38: #{tpu_custom_call.1} parent=12 // pred_region
            _
          $region39: #{tpu_custom_call.1} parent=12 // pred_fallthru
            _
        $region13: #{tpu_custom_call.1} parent=8 // pred_fallthru
          _
        // Predicated region
        $region14: #{tpu_custom_call.1} parent=8 // pred_check
          _
        $region15: #{tpu_custom_call.1} parent=8 // pred_check_branch
          %15 = sbr.rel target = $region17
        $region16: #{tpu_custom_call.1} parent=8 // pred_region
          loop: start=0, step=1, limit=1
          $region18: #{tpu_custom_call.1} parent=16 // loop_pre_header
            _
          $region19: #{tpu_custom_call.1} parent=16 // loop_header
            %s18 = sphi 0, %s22
            %p19 = scmp.ge.s32.totalorder %s18, 1
            %s23 = sphi %s0, %s0
            %s24 = sphi [#allocation2], [#allocation2]
          $region20: #{tpu_custom_call.1} parent=16 // loop_header_branch
            %21 = sbr.rel (%p19) target = $region24
          $region21: #{tpu_custom_call.1} parent=16 // loop_body
            %v25 = vld [vmem:[%s23] sm:$0xff]
            %26 = vst [vmem:[%s24] sm:$0xff] %v25
            %v27 = vld [vmem:[%s23 + $0x80] sm:$0xff]
            %28 = vst [vmem:[%s24 + $0x8] sm:$0xff] %v27
          $region22: #{tpu_custom_call.1} parent=16 // loop_footer
            %s22 = sadd.s32 1, %s18
          $region23: #{tpu_custom_call.1} parent=16 // loop_footer_branch
            %17 = sbr.rel target = $region19
          $region24: #{tpu_custom_call.1} parent=16 // loop_exit
            _
        $region17: #{tpu_custom_call.1} parent=8 // pred_fallthru
          _
      $region9: #{tpu_custom_call.1} parent=4 // pred_fallthru
        _
      %45 = vnop
    $region5: #{tpu_custom_call.1} parent=1 // pred_fallthru
      _
    // Predicated region
    $region40: #{tpu_custom_call.1} parent=1 // pred_check
      _
    $region41: #{tpu_custom_call.1} parent=1 // pred_check_branch
      %47 = sbr.rel (0) target = $region43
    $region42: #{tpu_custom_call.1} parent=1 // pred_region
      _
    $region43: #{tpu_custom_call.1} parent=1 // pred_fallthru
      _
    // Predicated region
    $region44: #{tpu_custom_call.1} parent=1 // pred_check
      _
    $region45: #{tpu_custom_call.1} parent=1 // pred_check_branch
      %49 = sbr.rel (0) target = $region47
    $region46: #{tpu_custom_call.1} parent=1 // pred_region
      _
    $region47: #{tpu_custom_call.1} parent=1 // pred_fallthru
      _
    %v50 = vld [vmem:[#allocation2] sm:$0xff]
    %v51 = vld [vmem:[#allocation2 + $0x8] sm:$0xff]
    %v52 = vld [vmem:[%s1] sm:$0xff]
    %v53 = vld [vmem:[%s1 + $0x8] sm:$0xff]
    %v54 = vld [vmem:[%s1 + $0x10] sm:$0xff]
    %v55 = vld [vmem:[%s1 + $0x18] sm:$0xff]
    %v56 = vld [vmem:[%s1 + $0x20] sm:$0xff]
    %v57 = vld [vmem:[%s1 + $0x28] sm:$0xff]
    %v58 = vld [vmem:[%s1 + $0x30] sm:$0xff]
    %v59 = vld [vmem:[%s1 + $0x38] sm:$0xff]
    %v60 = vld [vmem:[%s1 + $0x40] sm:$0xff]
    %v61 = vld [vmem:[%s1 + $0x48] sm:$0xff]
    %v62 = vld [vmem:[%s1 + $0x50] sm:$0xff]
    %v63 = vld [vmem:[%s1 + $0x58] sm:$0xff]
    %v64 = vld [vmem:[%s1 + $0x60] sm:$0xff]
    %v65 = vld [vmem:[%s1 + $0x68] sm:$0xff]
    %v66 = vld [vmem:[%s1 + $0x70] sm:$0xff]
    %v67 = vld [vmem:[%s1 + $0x78] sm:$0xff]
    %v68 = vld [vmem:[%s1 + $0x80] sm:$0xff]
    %v69 = vld [vmem:[%s1 + $0x88] sm:$0xff]
    %v70 = vld [vmem:[%s1 + $0x90] sm:$0xff]
    %v71 = vld [vmem:[%s1 + $0x98] sm:$0xff]
    %v72 = vld [vmem:[%s1 + $0xa0] sm:$0xff]
    %v73 = vld [vmem:[%s1 + $0xa8] sm:$0xff]
    %v74 = vld [vmem:[%s1 + $0xb0] sm:$0xff]
    %v75 = vld [vmem:[%s1 + $0xb8] sm:$0xff]
    %v76 = vld [vmem:[%s1 + $0xc0] sm:$0xff]
    %v77 = vld [vmem:[%s1 + $0xc8] sm:$0xff]
    %v78 = vld [vmem:[%s1 + $0xd0] sm:$0xff]
    %v79 = vld [vmem:[%s1 + $0xd8] sm:$0xff]
    %v80 = vld [vmem:[%s1 + $0xe0] sm:$0xff]
    %v81 = vld [vmem:[%s1 + $0xe8] sm:$0xff]
    %v82 = vld [vmem:[%s1 + $0xf0] sm:$0xff]
    %v83 = vld [vmem:[%s1 + $0xf8] sm:$0xff]
    %vm84 = vcmask 261120
    %v86 = vsel %vm84, %v50, 0
    %v89 = vsel %vm84, %v52, 0
    %v92 = vsel %vm84, %v53, 0
    %v95 = vsel %vm84, %v54, 0
    %v98 = vsel %vm84, %v55, 0
    %v101 = vsel %vm84, %v56, 0
    %v104 = vsel %vm84, %v57, 0
    %v107 = vsel %vm84, %v58, 0
    %v110 = vsel %vm84, %v59, 0
    %v113 = vsel %vm84, %v60, 0
    %v116 = vsel %vm84, %v61, 0
    %v119 = vsel %vm84, %v62, 0
    %v122 = vsel %vm84, %v63, 0
    %v125 = vsel %vm84, %v64, 0
    %v128 = vsel %vm84, %v65, 0
    %v131 = vsel %vm84, %v66, 0
    %v134 = vsel %vm84, %v67, 0
    %136 = vmatprep.subr.mxu0 0.0
    %v137 = vand.u32 %v89, 4294901760
    %138 = vmatpush1.xpose.msra.mxu0 %v137
    %139 = vmatprep.subr.mxu0 0.0
    %v140 = vand.u32 %v92, 4294901760
    %141 = vmatpush1.xpose.msra.mxu0 %v140
    %142 = vmatprep.subr.mxu0 0.0
    %v143 = vand.u32 %v95, 4294901760
    %144 = vmatpush1.xpose.msra.mxu0 %v143
    %145 = vmatprep.subr.mxu0 0.0
    %v146 = vand.u32 %v98, 4294901760
    %147 = vmatpush1.xpose.msra.mxu0 %v146
    %148 = vmatprep.subr.mxu0 0.0
    %v149 = vand.u32 %v101, 4294901760
    %150 = vmatpush1.xpose.msra.mxu0 %v149
    %151 = vmatprep.subr.mxu0 0.0
    %v152 = vand.u32 %v104, 4294901760
    %153 = vmatpush1.xpose.msra.mxu0 %v152
    %154 = vmatprep.subr.mxu0 0.0
    %v155 = vand.u32 %v107, 4294901760
    %156 = vmatpush1.xpose.msra.mxu0 %v155
    %157 = vmatprep.subr.mxu0 0.0
    %v158 = vand.u32 %v110, 4294901760
    %159 = vmatpush1.xpose.msra.mxu0 %v158
    %160 = vmatprep.subr.mxu0 0.0
    %v161 = vand.u32 %v113, 4294901760
    %162 = vmatpush1.xpose.msra.mxu0 %v161
    %163 = vmatprep.subr.mxu0 0.0
    %v164 = vand.u32 %v116, 4294901760
    %165 = vmatpush1.xpose.msra.mxu0 %v164
    %166 = vmatprep.subr.mxu0 0.0
    %v167 = vand.u32 %v119, 4294901760
    %168 = vmatpush1.xpose.msra.mxu0 %v167
    %169 = vmatprep.subr.mxu0 0.0
    %v170 = vand.u32 %v122, 4294901760
    %171 = vmatpush1.xpose.msra.mxu0 %v170
    %172 = vmatprep.subr.mxu0 0.0
    %v173 = vand.u32 %v125, 4294901760
    %174 = vmatpush1.xpose.msra.mxu0 %v173
    %175 = vmatprep.subr.mxu0 0.0
    %v176 = vand.u32 %v128, 4294901760
    %177 = vmatpush1.xpose.msra.mxu0 %v176
    %178 = vmatprep.subr.mxu0 0.0
    %v179 = vand.u32 %v131, 4294901760
    %180 = vmatpush1.xpose.msra.mxu0 %v179
    %181 = vmatprep.subr.mxu0 0.0
    %v182 = vand.u32 %v134, 4294901760
    %183 = vmatpush1.xpose.msra.mxu0 %v182
    %184 = vmatprep.subr.mxu0 0.0
    %185 = vmatpush1.xpose.msra.mxu0 0.0
    %186 = vmatprep.subr.mxu0 0.0
    %187 = vmatpush1.xpose.msra.mxu0 0.0
    %188 = vmatprep.subr.mxu0 0.0
    %189 = vmatpush1.xpose.msra.mxu0 0.0
    %190 = vmatprep.subr.mxu0 0.0
    %191 = vmatpush1.xpose.msra.mxu0 0.0
    %192 = vmatprep.subr.mxu0 0.0
    %193 = vmatpush1.xpose.msra.mxu0 0.0
    %194 = vmatprep.subr.mxu0 0.0
    %195 = vmatpush1.xpose.msra.mxu0 0.0
    %196 = vmatprep.subr.mxu0 0.0
    %197 = vmatpush1.xpose.msra.mxu0 0.0
    %198 = vmatprep.subr.mxu0 0.0
    %199 = vmatpush1.xpose.msra.mxu0 0.0
    %200 = vmatprep.subr.mxu0 0.0
    %201 = vmatpush1.xpose.msra.mxu0 0.0
    %202 = vmatprep.subr.mxu0 0.0
    %203 = vmatpush1.xpose.msra.mxu0 0.0
    %204 = vmatprep.subr.mxu0 0.0
    %205 = vmatpush1.xpose.msra.mxu0 0.0
    %206 = vmatprep.subr.mxu0 0.0
    %207 = vmatpush1.xpose.msra.mxu0 0.0
    %208 = vmatprep.subr.mxu0 0.0
    %209 = vmatpush1.xpose.msra.mxu0 0.0
    %210 = vmatprep.subr.mxu0 0.0
    %211 = vmatpush1.xpose.msra.mxu0 0.0
    %212 = vmatprep.subr.mxu0 0.0
    %213 = vmatpush1.xpose.msra.mxu0 0.0
    %214 = vmatprep.subr.mxu0 0.0
    %215 = vmatpush1.xpose.msra.mxu0 0.0
    %216 = vmatprep.mubr.f32.mxu0 0.0
    %v217 = vand.u32 %v86, 4294901760
    %v218 = vsub.f32 %v86, %v217
    %v219 = vand.u32 %v218, 4294901760
    %v220 = vsub.f32 %v218, %v219
    %v221 = vand.u32 %v220, 4294901760
    %222 = vmatmul.mubr.f32.gmra.mrb[0].mxu0 %v221
    %v223 = vpop.f32.mrb[0].mxu0
    %v224 = vadd.f32 0.0, %v223
    %v225 = vpop.f32.mrb[0].mxu0
    %226 = vdwg.mxu0
    %227 = vmatprep.subr.mxu0 0.0
    %v228 = vand.u32 %v89, 4294901760
    %v229 = vsub.f32 %v89, %v228
    %v230 = vand.u32 %v229, 4294901760
    %v231 = vsub.f32 %v229, %v230
    %v232 = vand.u32 %v231, 4294901760
    %233 = vmatpush1.xpose.msra.mxu0 %v232
    %234 = vmatprep.subr.mxu0 0.0
    %v235 = vand.u32 %v92, 4294901760
    %v236 = vsub.f32 %v92, %v235
    %v237 = vand.u32 %v236, 4294901760
    %v238 = vsub.f32 %v236, %v237
    %v239 = vand.u32 %v238, 4294901760
    %240 = vmatpush1.xpose.msra.mxu0 %v239
    %241 = vmatprep.subr.mxu0 0.0
    %v242 = vand.u32 %v95, 4294901760
    %v243 = vsub.f32 %v95, %v242
    %v244 = vand.u32 %v243, 4294901760
    %v245 = vsub.f32 %v243, %v244
    %v246 = vand.u32 %v245, 4294901760
    %247 = vmatpush1.xpose.msra.mxu0 %v246
    %248 = vmatprep.subr.mxu0 0.0
    %v249 = vand.u32 %v98, 4294901760
    %v250 = vsub.f32 %v98, %v249
    %v251 = vand.u32 %v250, 4294901760
    %v252 = vsub.f32 %v250, %v251
    %v253 = vand.u32 %v252, 4294901760
    %254 = vmatpush1.xpose.msra.mxu0 %v253
    %255 = vmatprep.subr.mxu0 0.0
    %v256 = vand.u32 %v101, 4294901760
    %v257 = vsub.f32 %v101, %v256
    %v258 = vand.u32 %v257, 4294901760
    %v259 = vsub.f32 %v257, %v258
    %v260 = vand.u32 %v259, 4294901760
    %261 = vmatpush1.xpose.msra.mxu0 %v260
    %262 = vmatprep.subr.mxu0 0.0
    %v263 = vand.u32 %v104, 4294901760
    %v264 = vsub.f32 %v104, %v263
    %v265 = vand.u32 %v264, 4294901760
    %v266 = vsub.f32 %v264, %v265
    %v267 = vand.u32 %v266, 4294901760
    %268 = vmatpush1.xpose.msra.mxu0 %v267
    %269 = vmatprep.subr.mxu0 0.0
    %v270 = vand.u32 %v107, 4294901760
    %v271 = vsub.f32 %v107, %v270
    %v272 = vand.u32 %v271, 4294901760
    %v273 = vsub.f32 %v271, %v272
    %v274 = vand.u32 %v273, 4294901760
    %275 = vmatpush1.xpose.msra.mxu0 %v274
    %276 = vmatprep.subr.mxu0 0.0
    %v277 = vand.u32 %v110, 4294901760
    %v278 = vsub.f32 %v110, %v277
    %v279 = vand.u32 %v278, 4294901760
    %v280 = vsub.f32 %v278, %v279
    %v281 = vand.u32 %v280, 4294901760
    %282 = vmatpush1.xpose.msra.mxu0 %v281
    %283 = vmatprep.subr.mxu0 0.0
    %v284 = vand.u32 %v113, 4294901760
    %v285 = vsub.f32 %v113, %v284
    %v286 = vand.u32 %v285, 4294901760
    %v287 = vsub.f32 %v285, %v286
    %v288 = vand.u32 %v287, 4294901760
    %289 = vmatpush1.xpose.msra.mxu0 %v288
    %290 = vmatprep.subr.mxu0 0.0
    %v291 = vand.u32 %v116, 4294901760
    %v292 = vsub.f32 %v116, %v291
    %v293 = vand.u32 %v292, 4294901760
    %v294 = vsub.f32 %v292, %v293
    %v295 = vand.u32 %v294, 4294901760
    %296 = vmatpush1.xpose.msra.mxu0 %v295
    %297 = vmatprep.subr.mxu0 0.0
    %v298 = vand.u32 %v119, 4294901760
    %v299 = vsub.f32 %v119, %v298
    %v300 = vand.u32 %v299, 4294901760
    %v301 = vsub.f32 %v299, %v300
    %v302 = vand.u32 %v301, 4294901760
    %303 = vmatpush1.xpose.msra.mxu0 %v302
    %304 = vmatprep.subr.mxu0 0.0
    %v305 = vand.u32 %v122, 4294901760
    %v306 = vsub.f32 %v122, %v305
    %v307 = vand.u32 %v306, 4294901760
    %v308 = vsub.f32 %v306, %v307
    %v309 = vand.u32 %v308, 4294901760
    %310 = vmatpush1.xpose.msra.mxu0 %v309
    %311 = vmatprep.subr.mxu0 0.0
    %v312 = vand.u32 %v125, 4294901760
    %v313 = vsub.f32 %v125, %v312
    %v314 = vand.u32 %v313, 4294901760
    %v315 = vsub.f32 %v313, %v314
    %v316 = vand.u32 %v315, 4294901760
    %317 = vmatpush1.xpose.msra.mxu0 %v316
    %318 = vmatprep.subr.mxu0 0.0
    %v319 = vand.u32 %v128, 4294901760
    %v320 = vsub.f32 %v128, %v319
    %v321 = vand.u32 %v320, 4294901760
    %v322 = vsub.f32 %v320, %v321
    %v323 = vand.u32 %v322, 4294901760
    %324 = vmatpush1.xpose.msra.mxu0 %v323
    %325 = vmatprep.subr.mxu0 0.0
    %v326 = vand.u32 %v131, 4294901760
    %v327 = vsub.f32 %v131, %v326
    %v328 = vand.u32 %v327, 4294901760
    %v329 = vsub.f32 %v327, %v328
    %v330 = vand.u32 %v329, 4294901760
    %331 = vmatpush1.xpose.msra.mxu0 %v330
    %332 = vmatprep.subr.mxu0 0.0
    %v333 = vand.u32 %v134, 4294901760
    %v334 = vsub.f32 %v134, %v333
    %v335 = vand.u32 %v334, 4294901760
    %v336 = vsub.f32 %v334, %v335
    %v337 = vand.u32 %v336, 4294901760
    %338 = vmatpush1.xpose.msra.mxu0 %v337
    %339 = vmatprep.subr.mxu0 0.0
    %340 = vmatpush1.xpose.msra.mxu0 0.0
    %341 = vmatprep.subr.mxu0 0.0
    %342 = vmatpush1.xpose.msra.mxu0 0.0
    %343 = vmatprep.subr.mxu0 0.0
    %344 = vmatpush1.xpose.msra.mxu0 0.0
    %345 = vmatprep.subr.mxu0 0.0
    %346 = vmatpush1.xpose.msra.mxu0 0.0
    %347 = vmatprep.subr.mxu0 0.0
    %348 = vmatpush1.xpose.msra.mxu0 0.0
    %349 = vmatprep.subr.mxu0 0.0
    %350 = vmatpush1.xpose.msra.mxu0 0.0
    %351 = vmatprep.subr.mxu0 0.0
    %352 = vmatpush1.xpose.msra.mxu0 0.0
    %353 = vmatprep.subr.mxu0 0.0
    %354 = vmatpush1.xpose.msra.mxu0 0.0
    %355 = vmatprep.subr.mxu0 0.0
    %356 = vmatpush1.xpose.msra.mxu0 0.0
    %357 = vmatprep.subr.mxu0 0.0
    %358 = vmatpush1.xpose.msra.mxu0 0.0
    %359 = vmatprep.subr.mxu0 0.0
    %360 = vmatpush1.xpose.msra.mxu0 0.0
    %361 = vmatprep.subr.mxu0 0.0
    %362 = vmatpush1.xpose.msra.mxu0 0.0
    %363 = vmatprep.subr.mxu0 0.0
    %364 = vmatpush1.xpose.msra.mxu0 0.0
    %365 = vmatprep.subr.mxu0 0.0
    %366 = vmatpush1.xpose.msra.mxu0 0.0
    %367 = vmatprep.subr.mxu0 0.0
    %368 = vmatpush1.xpose.msra.mxu0 0.0
    %369 = vmatprep.subr.mxu0 0.0
    %370 = vmatpush1.xpose.msra.mxu0 0.0
    %371 = vmatprep.mubr.f32.mxu0 0.0
    %v372 = vand.u32 %v86, 4294901760
    %373 = vmatmul.mubr.f32.gmra.mrb[0].mxu0 %v372
    %v374 = vpop.f32.mrb[0].mxu0
    %v375 = vadd.f32 %v224, %v374
    %v376 = vpop.f32.mrb[0].mxu0
    %377 = vdwg.mxu0
    %378 = vmatprep.subr.mxu0 0.0
    %v379 = vand.u32 %v89, 4294901760
    %v380 = vsub.f32 %v89, %v379
    %381 = vmatpush1.xpose.msra.mxu0 %v380
    %382 = vmatprep.subr.mxu0 0.0
    %v383 = vand.u32 %v92, 4294901760
    %v384 = vsub.f32 %v92, %v383
    %385 = vmatpush1.xpose.msra.mxu0 %v384
    %386 = vmatprep.subr.mxu0 0.0
    %v387 = vand.u32 %v95, 4294901760
    %v388 = vsub.f32 %v95, %v387
    %389 = vmatpush1.xpose.msra.mxu0 %v388
    %390 = vmatprep.subr.mxu0 0.0
    %v391 = vand.u32 %v98, 4294901760
    %v392 = vsub.f32 %v98, %v391
    %393 = vmatpush1.xpose.msra.mxu0 %v392
    %394 = vmatprep.subr.mxu0 0.0
    %v395 = vand.u32 %v101, 4294901760
    %v396 = vsub.f32 %v101, %v395
    %397 = vmatpush1.xpose.msra.mxu0 %v396
    %398 = vmatprep.subr.mxu0 0.0
    %v399 = vand.u32 %v104, 4294901760
    %v400 = vsub.f32 %v104, %v399
    %401 = vmatpush1.xpose.msra.mxu0 %v400
    %402 = vmatprep.subr.mxu0 0.0
    %v403 = vand.u32 %v107, 4294901760
    %v404 = vsub.f32 %v107, %v403
    %405 = vmatpush1.xpose.msra.mxu0 %v404
    %406 = vmatprep.subr.mxu0 0.0
    %v407 = vand.u32 %v110, 4294901760
    %v408 = vsub.f32 %v110, %v407
    %409 = vmatpush1.xpose.msra.mxu0 %v408
    %410 = vmatprep.subr.mxu0 0.0
    %v411 = vand.u32 %v113, 4294901760
    %v412 = vsub.f32 %v113, %v411
    %413 = vmatpush1.xpose.msra.mxu0 %v412
    %414 = vmatprep.subr.mxu0 0.0
    %v415 = vand.u32 %v116, 4294901760
    %v416 = vsub.f32 %v116, %v415
    %417 = vmatpush1.xpose.msra.mxu0 %v416
    %418 = vmatprep.subr.mxu0 0.0
    %v419 = vand.u32 %v119, 4294901760
    %v420 = vsub.f32 %v119, %v419
    %421 = vmatpush1.xpose.msra.mxu0 %v420
    %422 = vmatprep.subr.mxu0 0.0
    %v423 = vand.u32 %v122, 4294901760
    %v424 = vsub.f32 %v122, %v423
    %425 = vmatpush1.xpose.msra.mxu0 %v424
    %426 = vmatprep.subr.mxu0 0.0
    %v427 = vand.u32 %v125, 4294901760
    %v428 = vsub.f32 %v125, %v427
    %429 = vmatpush1.xpose.msra.mxu0 %v428
    %430 = vmatprep.subr.mxu0 0.0
    %v431 = vand.u32 %v128, 4294901760
    %v432 = vsub.f32 %v128, %v431
    %433 = vmatpush1.xpose.msra.mxu0 %v432
    %434 = vmatprep.subr.mxu0 0.0
    %v435 = vand.u32 %v131, 4294901760
    %v436 = vsub.f32 %v131, %v435
    %437 = vmatpush1.xpose.msra.mxu0 %v436
    %438 = vmatprep.subr.mxu0 0.0
    %v439 = vand.u32 %v134, 4294901760
    %v440 = vsub.f32 %v134, %v439
    %441 = vmatpush1.xpose.msra.mxu0 %v440
    %442 = vmatprep.subr.mxu0 0.0
    %443 = vmatpush1.xpose.msra.mxu0 0.0
    %444 = vmatprep.subr.mxu0 0.0
    %445 = vmatpush1.xpose.msra.mxu0 0.0
    %446 = vmatprep.subr.mxu0 0.0
    %447 = vmatpush1.xpose.msra.mxu0 0.0
    %448 = vmatprep.subr.mxu0 0.0
    %449 = vmatpush1.xpose.msra.mxu0 0.0
    %450 = vmatprep.subr.mxu0 0.0
    %451 = vmatpush1.xpose.msra.mxu0 0.0
    %452 = vmatprep.subr.mxu0 0.0
    %453 = vmatpush1.xpose.msra.mxu0 0.0
    %454 = vmatprep.subr.mxu0 0.0
    %455 = vmatpush1.xpose.msra.mxu0 0.0
    %456 = vmatprep.subr.mxu0 0.0
    %457 = vmatpush1.xpose.msra.mxu0 0.0
    %458 = vmatprep.subr.mxu0 0.0
    %459 = vmatpush1.xpose.msra.mxu0 0.0
    %460 = vmatprep.subr.mxu0 0.0
    %461 = vmatpush1.xpose.msra.mxu0 0.0
    %462 = vmatprep.subr.mxu0 0.0
    %463 = vmatpush1.xpose.msra.mxu0 0.0
    %464 = vmatprep.subr.mxu0 0.0
    %465 = vmatpush1.xpose.msra.mxu0 0.0
    %466 = vmatprep.subr.mxu0 0.0
    %467 = vmatpush1.xpose.msra.mxu0 0.0
    %468 = vmatprep.subr.mxu0 0.0
    %469 = vmatpush1.xpose.msra.mxu0 0.0
    %470 = vmatprep.subr.mxu0 0.0
    %471 = vmatpush1.xpose.msra.mxu0 0.0
    %472 = vmatprep.subr.mxu0 0.0
    %473 = vmatpush1.xpose.msra.mxu0 0.0
    %474 = vmatprep.mubr.f32.mxu0 0.0
    %v475 = vand.u32 %v86, 4294901760
    %v476 = vsub.f32 %v86, %v475
    %477 = vmatmul.mubr.f32.gmra.mrb[0].mxu0 %v476
    %v478 = vpop.f32.mrb[0].mxu0
    %v479 = vadd.f32 %v375, %v478
    %v480 = vpop.f32.mrb[0].mxu0
    %481 = vdwg.mxu0
    %482 = vmatprep.subr.mxu0 0.0
    %v483 = vand.u32 %v89, 4294901760
    %484 = vmatpush1.xpose.msra.mxu0 %v483
    %485 = vmatprep.subr.mxu0 0.0
    %v486 = vand.u32 %v92, 4294901760
    %487 = vmatpush1.xpose.msra.mxu0 %v486
    %488 = vmatprep.subr.mxu0 0.0
    %v489 = vand.u32 %v95, 4294901760
    %490 = vmatpush1.xpose.msra.mxu0 %v489
    %491 = vmatprep.subr.mxu0 0.0
    %v492 = vand.u32 %v98, 4294901760
    %493 = vmatpush1.xpose.msra.mxu0 %v492
    %494 = vmatprep.subr.mxu0 0.0
    %v495 = vand.u32 %v101, 4294901760
    %496 = vmatpush1.xpose.msra.mxu0 %v495
    %497 = vmatprep.subr.mxu0 0.0
    %v498 = vand.u32 %v104, 4294901760
    %499 = vmatpush1.xpose.msra.mxu0 %v498
    %500 = vmatprep.subr.mxu0 0.0
    %v501 = vand.u32 %v107, 4294901760
    %502 = vmatpush1.xpose.msra.mxu0 %v501
    %503 = vmatprep.subr.mxu0 0.0
    %v504 = vand.u32 %v110, 4294901760
    %505 = vmatpush1.xpose.msra.mxu0 %v504
    %506 = vmatprep.subr.mxu0 0.0
    %v507 = vand.u32 %v113, 4294901760
    %508 = vmatpush1.xpose.msra.mxu0 %v507
    %509 = vmatprep.subr.mxu0 0.0
    %v510 = vand.u32 %v116, 4294901760
    %511 = vmatpush1.xpose.msra.mxu0 %v510
    %512 = vmatprep.subr.mxu0 0.0
    %v513 = vand.u32 %v119, 4294901760
    %514 = vmatpush1.xpose.msra.mxu0 %v513
    %515 = vmatprep.subr.mxu0 0.0
    %v516 = vand.u32 %v122, 4294901760
    %517 = vmatpush1.xpose.msra.mxu0 %v516
    %518 = vmatprep.subr.mxu0 0.0
    %v519 = vand.u32 %v125, 4294901760
    %520 = vmatpush1.xpose.msra.mxu0 %v519
    %521 = vmatprep.subr.mxu0 0.0
    %v522 = vand.u32 %v128, 4294901760
    %523 = vmatpush1.xpose.msra.mxu0 %v522
    %524 = vmatprep.subr.mxu0 0.0
    %v525 = vand.u32 %v131, 4294901760
    %526 = vmatpush1.xpose.msra.mxu0 %v525
    %527 = vmatprep.subr.mxu0 0.0
    %v528 = vand.u32 %v134, 4294901760
    %529 = vmatpush1.xpose.msra.mxu0 %v528
    %530 = vmatprep.subr.mxu0 0.0
    %531 = vmatpush1.xpose.msra.mxu0 0.0
    %532 = vmatprep.subr.mxu0 0.0
    %533 = vmatpush1.xpose.msra.mxu0 0.0
    %534 = vmatprep.subr.mxu0 0.0
    %535 = vmatpush1.xpose.msra.mxu0 0.0
    %536 = vmatprep.subr.mxu0 0.0
    %537 = vmatpush1.xpose.msra.mxu0 0.0
    %538 = vmatprep.subr.mxu0 0.0
    %539 = vmatpush1.xpose.msra.mxu0 0.0
    %540 = vmatprep.subr.mxu0 0.0
    %541 = vmatpush1.xpose.msra.mxu0 0.0
    %542 = vmatprep.subr.mxu0 0.0
    %543 = vmatpush1.xpose.msra.mxu0 0.0
    %544 = vmatprep.subr.mxu0 0.0
    %545 = vmatpush1.xpose.msra.mxu0 0.0
    %546 = vmatprep.subr.mxu0 0.0
    %547 = vmatpush1.xpose.msra.mxu0 0.0
    %548 = vmatprep.subr.mxu0 0.0
    %549 = vmatpush1.xpose.msra.mxu0 0.0
    %550 = vmatprep.subr.mxu0 0.0
    %551 = vmatpush1.xpose.msra.mxu0 0.0
    %552 = vmatprep.subr.mxu0 0.0
    %553 = vmatpush1.xpose.msra.mxu0 0.0
    %554 = vmatprep.subr.mxu0 0.0
    %555 = vmatpush1.xpose.msra.mxu0 0.0
    %556 = vmatprep.subr.mxu0 0.0
    %557 = vmatpush1.xpose.msra.mxu0 0.0
    %558 = vmatprep.subr.mxu0 0.0
    %559 = vmatpush1.xpose.msra.mxu0 0.0
    %560 = vmatprep.subr.mxu0 0.0
    %561 = vmatpush1.xpose.msra.mxu0 0.0
    %562 = vmatprep.mubr.f32.mxu0 0.0
    %v563 = vand.u32 %v86, 4294901760
    %v564 = vsub.f32 %v86, %v563
    %v565 = vand.u32 %v564, 4294901760
    %566 = vmatmul.mubr.f32.gmra.mrb[0].mxu0 %v565
    %v567 = vpop.f32.mrb[0].mxu0
    %v568 = vadd.f32 %v479, %v567
    %v569 = vpop.f32.mrb[0].mxu0
    %570 = vdwg.mxu0
    %571 = vmatprep.subr.mxu0 0.0
    %v572 = vand.u32 %v89, 4294901760
    %v573 = vsub.f32 %v89, %v572
    %v574 = vand.u32 %v573, 4294901760
    %575 = vmatpush1.xpose.msra.mxu0 %v574
    %576 = vmatprep.subr.mxu0 0.0
    %v577 = vand.u32 %v92, 4294901760
    %v578 = vsub.f32 %v92, %v577
    %v579 = vand.u32 %v578, 4294901760
    %580 = vmatpush1.xpose.msra.mxu0 %v579
    %581 = vmatprep.subr.mxu0 0.0
    %v582 = vand.u32 %v95, 4294901760
    %v583 = vsub.f32 %v95, %v582
    %v584 = vand.u32 %v583, 4294901760
    %585 = vmatpush1.xpose.msra.mxu0 %v584
    %586 = vmatprep.subr.mxu0 0.0
    %v587 = vand.u32 %v98, 4294901760
    %v588 = vsub.f32 %v98, %v587
    %v589 = vand.u32 %v588, 4294901760
    %590 = vmatpush1.xpose.msra.mxu0 %v589
    %591 = vmatprep.subr.mxu0 0.0
    %v592 = vand.u32 %v101, 4294901760
    %v593 = vsub.f32 %v101, %v592
    %v594 = vand.u32 %v593, 4294901760
    %595 = vmatpush1.xpose.msra.mxu0 %v594
    %596 = vmatprep.subr.mxu0 0.0
    %v597 = vand.u32 %v104, 4294901760
    %v598 = vsub.f32 %v104, %v597
    %v599 = vand.u32 %v598, 4294901760
    %600 = vmatpush1.xpose.msra.mxu0 %v599
    %601 = vmatprep.subr.mxu0 0.0
    %v602 = vand.u32 %v107, 4294901760
    %v603 = vsub.f32 %v107, %v602
    %v604 = vand.u32 %v603, 4294901760
    %605 = vmatpush1.xpose.msra.mxu0 %v604
    %606 = vmatprep.subr.mxu0 0.0
    %v607 = vand.u32 %v110, 4294901760
    %v608 = vsub.f32 %v110, %v607
    %v609 = vand.u32 %v608, 4294901760
    %610 = vmatpush1.xpose.msra.mxu0 %v609
    %611 = vmatprep.subr.mxu0 0.0
    %v612 = vand.u32 %v113, 4294901760
    %v613 = vsub.f32 %v113, %v612
    %v614 = vand.u32 %v613, 4294901760
    %615 = vmatpush1.xpose.msra.mxu0 %v614
    %616 = vmatprep.subr.mxu0 0.0
    %v617 = vand.u32 %v116, 4294901760
    %v618 = vsub.f32 %v116, %v617
    %v619 = vand.u32 %v618, 4294901760
    %620 = vmatpush1.xpose.msra.mxu0 %v619
    %621 = vmatprep.subr.mxu0 0.0
    %v622 = vand.u32 %v119, 4294901760
    %v623 = vsub.f32 %v119, %v622
    %v624 = vand.u32 %v623, 4294901760
    %625 = vmatpush1.xpose.msra.mxu0 %v624
    %626 = vmatprep.subr.mxu0 0.0
    %v627 = vand.u32 %v122, 4294901760
    %v628 = vsub.f32 %v122, %v627
    %v629 = vand.u32 %v628, 4294901760
    %630 = vmatpush1.xpose.msra.mxu0 %v629
    %631 = vmatprep.subr.mxu0 0.0
    %v632 = vand.u32 %v125, 4294901760
    %v633 = vsub.f32 %v125, %v632
    %v634 = vand.u32 %v633, 4294901760
    %635 = vmatpush1.xpose.msra.mxu0 %v634
    %636 = vmatprep.subr.mxu0 0.0
    %v637 = vand.u32 %v128, 4294901760
    %v638 = vsub.f32 %v128, %v637
    %v639 = vand.u32 %v638, 4294901760
    %640 = vmatpush1.xpose.msra.mxu0 %v639
    %641 = vmatprep.subr.mxu0 0.0
    %v642 = vand.u32 %v131, 4294901760
    %v643 = vsub.f32 %v131, %v642
    %v644 = vand.u32 %v643, 4294901760
    %645 = vmatpush1.xpose.msra.mxu0 %v644
    %646 = vmatprep.subr.mxu0 0.0
    %v647 = vand.u32 %v134, 4294901760
    %v648 = vsub.f32 %v134, %v647
    %v649 = vand.u32 %v648, 4294901760
    %650 = vmatpush1.xpose.msra.mxu0 %v649
    %651 = vmatprep.subr.mxu0 0.0
    %652 = vmatpush1.xpose.msra.mxu0 0.0
    %653 = vmatprep.subr.mxu0 0.0
    %654 = vmatpush1.xpose.msra.mxu0 0.0
    %655 = vmatprep.subr.mxu0 0.0
    %656 = vmatpush1.xpose.msra.mxu0 0.0
    %657 = vmatprep.subr.mxu0 0.0
    %658 = vmatpush1.xpose.msra.mxu0 0.0
    %659 = vmatprep.subr.mxu0 0.0
    %660 = vmatpush1.xpose.msra.mxu0 0.0
    %661 = vmatprep.subr.mxu0 0.0
    %662 = vmatpush1.xpose.msra.mxu0 0.0
    %663 = vmatprep.subr.mxu0 0.0
    %664 = vmatpush1.xpose.msra.mxu0 0.0
    %665 = vmatprep.subr.mxu0 0.0
    %666 = vmatpush1.xpose.msra.mxu0 0.0
    %667 = vmatprep.subr.mxu0 0.0
    %668 = vmatpush1.xpose.msra.mxu0 0.0
    %669 = vmatprep.subr.mxu0 0.0
    %670 = vmatpush1.xpose.msra.mxu0 0.0
    %671 = vmatprep.subr.mxu0 0.0
    %672 = vmatpush1.xpose.msra.mxu0 0.0
    %673 = vmatprep.subr.mxu0 0.0
    %674 = vmatpush1.xpose.msra.mxu0 0.0
    %675 = vmatprep.subr.mxu0 0.0
    %676 = vmatpush1.xpose.msra.mxu0 0.0
    %677 = vmatprep.subr.mxu0 0.0
    %678 = vmatpush1.xpose.msra.mxu0 0.0
    %679 = vmatprep.subr.mxu0 0.0
    %680 = vmatpush1.xpose.msra.mxu0 0.0
    %681 = vmatprep.subr.mxu0 0.0
    %682 = vmatpush1.xpose.msra.mxu0 0.0
    %683 = vmatprep.mubr.f32.mxu0 0.0
    %v684 = vand.u32 %v86, 4294901760
    %685 = vmatmul.mubr.f32.gmra.mrb[0].mxu0 %v684
    %v686 = vpop.f32.mrb[0].mxu0
    %v687 = vadd.f32 %v568, %v686
    %v688 = vpop.f32.mrb[0].mxu0
    %689 = vdwg.mxu0
    %690 = vmatprep.subr.mxu0 0.0
    %v691 = vand.u32 %v89, 4294901760
    %692 = vmatpush1.xpose.msra.mxu0 %v691
    %693 = vmatprep.subr.mxu0 0.0
    %v694 = vand.u32 %v92, 4294901760
    %695 = vmatpush1.xpose.msra.mxu0 %v694
    %696 = vmatprep.subr.mxu0 0.0
    %v697 = vand.u32 %v95, 4294901760
    %698 = vmatpush1.xpose.msra.mxu0 %v697
    %699 = vmatprep.subr.mxu0 0.0
    %v700 = vand.u32 %v98, 4294901760
    %701 = vmatpush1.xpose.msra.mxu0 %v700
    %702 = vmatprep.subr.mxu0 0.0
    %v703 = vand.u32 %v101, 4294901760
    %704 = vmatpush1.xpose.msra.mxu0 %v703
    %705 = vmatprep.subr.mxu0 0.0
    %v706 = vand.u32 %v104, 4294901760
    %707 = vmatpush1.xpose.msra.mxu0 %v706
    %708 = vmatprep.subr.mxu0 0.0
    %v709 = vand.u32 %v107, 4294901760
    %710 = vmatpush1.xpose.msra.mxu0 %v709
    %711 = vmatprep.subr.mxu0 0.0
    %v712 = vand.u32 %v110, 4294901760
    %713 = vmatpush1.xpose.msra.mxu0 %v712
    %714 = vmatprep.subr.mxu0 0.0
    %v715 = vand.u32 %v113, 4294901760
    %716 = vmatpush1.xpose.msra.mxu0 %v715
    %717 = vmatprep.subr.mxu0 0.0
    %v718 = vand.u32 %v116, 4294901760
    %719 = vmatpush1.xpose.msra.mxu0 %v718
    %720 = vmatprep.subr.mxu0 0.0
    %v721 = vand.u32 %v119, 4294901760
    %722 = vmatpush1.xpose.msra.mxu0 %v721
    %723 = vmatprep.subr.mxu0 0.0
    %v724 = vand.u32 %v122, 4294901760
    %725 = vmatpush1.xpose.msra.mxu0 %v724
    %726 = vmatprep.subr.mxu0 0.0
    %v727 = vand.u32 %v125, 4294901760
    %728 = vmatpush1.xpose.msra.mxu0 %v727
    %729 = vmatprep.subr.mxu0 0.0
    %v730 = vand.u32 %v128, 4294901760
    %731 = vmatpush1.xpose.msra.mxu0 %v730
    %732 = vmatprep.subr.mxu0 0.0
    %v733 = vand.u32 %v131, 4294901760
    %734 = vmatpush1.xpose.msra.mxu0 %v733
    %735 = vmatprep.subr.mxu0 0.0
    %v736 = vand.u32 %v134, 4294901760
    %737 = vmatpush1.xpose.msra.mxu0 %v736
    %738 = vmatprep.subr.mxu0 0.0
    %739 = vmatpush1.xpose.msra.mxu0 0.0
    %740 = vmatprep.subr.mxu0 0.0
    %741 = vmatpush1.xpose.msra.mxu0 0.0
    %742 = vmatprep.subr.mxu0 0.0
    %743 = vmatpush1.xpose.msra.mxu0 0.0
    %744 = vmatprep.subr.mxu0 0.0
    %745 = vmatpush1.xpose.msra.mxu0 0.0
    %746 = vmatprep.subr.mxu0 0.0
    %747 = vmatpush1.xpose.msra.mxu0 0.0
    %748 = vmatprep.subr.mxu0 0.0
    %749 = vmatpush1.xpose.msra.mxu0 0.0
    %750 = vmatprep.subr.mxu0 0.0
    %751 = vmatpush1.xpose.msra.mxu0 0.0
    %752 = vmatprep.subr.mxu0 0.0
    %753 = vmatpush1.xpose.msra.mxu0 0.0
    %754 = vmatprep.subr.mxu0 0.0
    %755 = vmatpush1.xpose.msra.mxu0 0.0
    %756 = vmatprep.subr.mxu0 0.0
    %757 = vmatpush1.xpose.msra.mxu0 0.0
    %758 = vmatprep.subr.mxu0 0.0
    %759 = vmatpush1.xpose.msra.mxu0 0.0
    %760 = vmatprep.subr.mxu0 0.0
    %761 = vmatpush1.xpose.msra.mxu0 0.0
    %762 = vmatprep.subr.mxu0 0.0
    %763 = vmatpush1.xpose.msra.mxu0 0.0
    %764 = vmatprep.subr.mxu0 0.0
    %765 = vmatpush1.xpose.msra.mxu0 0.0
    %766 = vmatprep.subr.mxu0 0.0
    %767 = vmatpush1.xpose.msra.mxu0 0.0
    %768 = vmatprep.subr.mxu0 0.0
    %769 = vmatpush1.xpose.msra.mxu0 0.0
    %770 = vmatprep.mubr.f32.mxu0 0.0
    %v771 = vand.u32 %v86, 4294901760
    %772 = vmatmul.mubr.f32.gmra.mrb[0].mxu0 %v771
    %v773 = vpop.f32.mrb[0].mxu0
    %v774 = vadd.f32 %v687, %v773
    %v775 = vpop.f32.mrb[0].mxu0
    %776 = vdwg.mxu0
    %v778 = vsel %vm84, %v51, 0
    %v781 = vsel %vm84, %v68, 0
    %v784 = vsel %vm84, %v69, 0
    %v787 = vsel %vm84, %v70, 0
    %v790 = vsel %vm84, %v71, 0
    %v793 = vsel %vm84, %v72, 0
    %v796 = vsel %vm84, %v73, 0
    %v799 = vsel %vm84, %v74, 0
    %v802 = vsel %vm84, %v75, 0
    %v805 = vsel %vm84, %v76, 0
    %v808 = vsel %vm84, %v77, 0
    %v811 = vsel %vm84, %v78, 0
    %v814 = vsel %vm84, %v79, 0
    %v817 = vsel %vm84, %v80, 0
    %v820 = vsel %vm84, %v81, 0
    %v823 = vsel %vm84, %v82, 0
    %v826 = vsel %vm84, %v83, 0
    %828 = vmatprep.subr.mxu0 0.0
    %v829 = vand.u32 %v781, 4294901760
    %830 = vmatpush1.xpose.msra.mxu0 %v829
    %831 = vmatprep.subr.mxu0 0.0
    %v832 = vand.u32 %v784, 4294901760
    %833 = vmatpush1.xpose.msra.mxu0 %v832
    %834 = vmatprep.subr.mxu0 0.0
    %v835 = vand.u32 %v787, 4294901760
    %836 = vmatpush1.xpose.msra.mxu0 %v835
    %837 = vmatprep.subr.mxu0 0.0
    %v838 = vand.u32 %v790, 4294901760
    %839 = vmatpush1.xpose.msra.mxu0 %v838
    %840 = vmatprep.subr.mxu0 0.0
    %v841 = vand.u32 %v793, 4294901760
    %842 = vmatpush1.xpose.msra.mxu0 %v841
    %843 = vmatprep.subr.mxu0 0.0
    %v844 = vand.u32 %v796, 4294901760
    %845 = vmatpush1.xpose.msra.mxu0 %v844
    %846 = vmatprep.subr.mxu0 0.0
    %v847 = vand.u32 %v799, 4294901760
    %848 = vmatpush1.xpose.msra.mxu0 %v847
    %849 = vmatprep.subr.mxu0 0.0
    %v850 = vand.u32 %v802, 4294901760
    %851 = vmatpush1.xpose.msra.mxu0 %v850
    %852 = vmatprep.subr.mxu0 0.0
    %v853 = vand.u32 %v805, 4294901760
    %854 = vmatpush1.xpose.msra.mxu0 %v853
    %855 = vmatprep.subr.mxu0 0.0
    %v856 = vand.u32 %v808, 4294901760
    %857 = vmatpush1.xpose.msra.mxu0 %v856
    %858 = vmatprep.subr.mxu0 0.0
    %v859 = vand.u32 %v811, 4294901760
    %860 = vmatpush1.xpose.msra.mxu0 %v859
    %861 = vmatprep.subr.mxu0 0.0
    %v862 = vand.u32 %v814, 4294901760
    %863 = vmatpush1.xpose.msra.mxu0 %v862
    %864 = vmatprep.subr.mxu0 0.0
    %v865 = vand.u32 %v817, 4294901760
    %866 = vmatpush1.xpose.msra.mxu0 %v865
    %867 = vmatprep.subr.mxu0 0.0
    %v868 = vand.u32 %v820, 4294901760
    %869 = vmatpush1.xpose.msra.mxu0 %v868
    %870 = vmatprep.subr.mxu0 0.0
    %v871 = vand.u32 %v823, 4294901760
    %872 = vmatpush1.xpose.msra.mxu0 %v871
    %873 = vmatprep.subr.mxu0 0.0
    %v874 = vand.u32 %v826, 4294901760
    %875 = vmatpush1.xpose.msra.mxu0 %v874
    %876 = vmatprep.subr.mxu0 0.0
    %877 = vmatpush1.xpose.msra.mxu0 0.0
    %878 = vmatprep.subr.mxu0 0.0
    %879 = vmatpush1.xpose.msra.mxu0 0.0
    %880 = vmatprep.subr.mxu0 0.0
    %881 = vmatpush1.xpose.msra.mxu0 0.0
    %882 = vmatprep.subr.mxu0 0.0
    %883 = vmatpush1.xpose.msra.mxu0 0.0
    %884 = vmatprep.subr.mxu0 0.0
    %885 = vmatpush1.xpose.msra.mxu0 0.0
    %886 = vmatprep.subr.mxu0 0.0
    %887 = vmatpush1.xpose.msra.mxu0 0.0
    %888 = vmatprep.subr.mxu0 0.0
    %889 = vmatpush1.xpose.msra.mxu0 0.0
    %890 = vmatprep.subr.mxu0 0.0
    %891 = vmatpush1.xpose.msra.mxu0 0.0
    %892 = vmatprep.subr.mxu0 0.0
    %893 = vmatpush1.xpose.msra.mxu0 0.0
    %894 = vmatprep.subr.mxu0 0.0
    %895 = vmatpush1.xpose.msra.mxu0 0.0
    %896 = vmatprep.subr.mxu0 0.0
    %897 = vmatpush1.xpose.msra.mxu0 0.0
    %898 = vmatprep.subr.mxu0 0.0
    %899 = vmatpush1.xpose.msra.mxu0 0.0
    %900 = vmatprep.subr.mxu0 0.0
    %901 = vmatpush1.xpose.msra.mxu0 0.0
    %902 = vmatprep.subr.mxu0 0.0
    %903 = vmatpush1.xpose.msra.mxu0 0.0
    %904 = vmatprep.subr.mxu0 0.0
    %905 = vmatpush1.xpose.msra.mxu0 0.0
    %906 = vmatprep.subr.mxu0 0.0
    %907 = vmatpush1.xpose.msra.mxu0 0.0
    %908 = vmatprep.mubr.f32.mxu0 0.0
    %v909 = vand.u32 %v778, 4294901760
    %v910 = vsub.f32 %v778, %v909
    %v911 = vand.u32 %v910, 4294901760
    %v912 = vsub.f32 %v910, %v911
    %v913 = vand.u32 %v912, 4294901760
    %914 = vmatmul.mubr.f32.gmra.mrb[0].mxu0 %v913
    %v915 = vpop.f32.mrb[0].mxu0
    %v916 = vadd.f32 0.0, %v915
    %v917 = vpop.f32.mrb[0].mxu0
    %918 = vdwg.mxu0
    %919 = vmatprep.subr.mxu0 0.0
    %v920 = vand.u32 %v781, 4294901760
    %v921 = vsub.f32 %v781, %v920
    %v922 = vand.u32 %v921, 4294901760
    %v923 = vsub.f32 %v921, %v922
    %v924 = vand.u32 %v923, 4294901760
    %925 = vmatpush1.xpose.msra.mxu0 %v924
    %926 = vmatprep.subr.mxu0 0.0
    %v927 = vand.u32 %v784, 4294901760
    %v928 = vsub.f32 %v784, %v927
    %v929 = vand.u32 %v928, 4294901760
    %v930 = vsub.f32 %v928, %v929
    %v931 = vand.u32 %v930, 4294901760
    %932 = vmatpush1.xpose.msra.mxu0 %v931
    %933 = vmatprep.subr.mxu0 0.0
    %v934 = vand.u32 %v787, 4294901760
    %v935 = vsub.f32 %v787, %v934
    %v936 = vand.u32 %v935, 4294901760
    %v937 = vsub.f32 %v935, %v936
    %v938 = vand.u32 %v937, 4294901760
    %939 = vmatpush1.xpose.msra.mxu0 %v938
    %940 = vmatprep.subr.mxu0 0.0
    %v941 = vand.u32 %v790, 4294901760
    %v942 = vsub.f32 %v790, %v941
    %v943 = vand.u32 %v942, 4294901760
    %v944 = vsub.f32 %v942, %v943
    %v945 = vand.u32 %v944, 4294901760
    %946 = vmatpush1.xpose.msra.mxu0 %v945
    %947 = vmatprep.subr.mxu0 0.0
    %v948 = vand.u32 %v793, 4294901760
    %v949 = vsub.f32 %v793, %v948
    %v950 = vand.u32 %v949, 4294901760
    %v951 = vsub.f32 %v949, %v950
    %v952 = vand.u32 %v951, 4294901760
    %953 = vmatpush1.xpose.msra.mxu0 %v952
    %954 = vmatprep.subr.mxu0 0.0
    %v955 = vand.u32 %v796, 4294901760
    %v956 = vsub.f32 %v796, %v955
    %v957 = vand.u32 %v956, 4294901760
    %v958 = vsub.f32 %v956, %v957
    %v959 = vand.u32 %v958, 4294901760
    %960 = vmatpush1.xpose.msra.mxu0 %v959
    %961 = vmatprep.subr.mxu0 0.0
    %v962 = vand.u32 %v799, 4294901760
    %v963 = vsub.f32 %v799, %v962
    %v964 = vand.u32 %v963, 4294901760
    %v965 = vsub.f32 %v963, %v964
    %v966 = vand.u32 %v965, 4294901760
    %967 = vmatpush1.xpose.msra.mxu0 %v966
    %968 = vmatprep.subr.mxu0 0.0
    %v969 = vand.u32 %v802, 4294901760
    %v970 = vsub.f32 %v802, %v969
    %v971 = vand.u32 %v970, 4294901760
    %v972 = vsub.f32 %v970, %v971
    %v973 = vand.u32 %v972, 4294901760
    %974 = vmatpush1.xpose.msra.mxu0 %v973
    %975 = vmatprep.subr.mxu0 0.0
    %v976 = vand.u32 %v805, 4294901760
    %v977 = vsub.f32 %v805, %v976
    %v978 = vand.u32 %v977, 4294901760
    %v979 = vsub.f32 %v977, %v978
    %v980 = vand.u32 %v979, 4294901760
    %981 = vmatpush1.xpose.msra.mxu0 %v980
    %982 = vmatprep.subr.mxu0 0.0
    %v983 = vand.u32 %v808, 4294901760
    %v984 = vsub.f32 %v808, %v983
    %v985 = vand.u32 %v984, 4294901760
    %v986 = vsub.f32 %v984, %v985
    %v987 = vand.u32 %v986, 4294901760
    %988 = vmatpush1.xpose.msra.mxu0 %v987
    %989 = vmatprep.subr.mxu0 0.0
    %v990 = vand.u32 %v811, 4294901760
    %v991 = vsub.f32 %v811, %v990
    %v992 = vand.u32 %v991, 4294901760
    %v993 = vsub.f32 %v991, %v992
    %v994 = vand.u32 %v993, 4294901760
    %995 = vmatpush1.xpose.msra.mxu0 %v994
    %996 = vmatprep.subr.mxu0 0.0
    %v997 = vand.u32 %v814, 4294901760
    %v998 = vsub.f32 %v814, %v997
    %v999 = vand.u32 %v998, 4294901760
    %v1000 = vsub.f32 %v998, %v999
    %v1001 = vand.u32 %v1000, 4294901760
    %1002 = vmatpush1.xpose.msra.mxu0 %v1001
    %1003 = vmatprep.subr.mxu0 0.0
    %v1004 = vand.u32 %v817, 4294901760
    %v1005 = vsub.f32 %v817, %v1004
    %v1006 = vand.u32 %v1005, 4294901760
    %v1007 = vsub.f32 %v1005, %v1006
    %v1008 = vand.u32 %v1007, 4294901760
    %1009 = vmatpush1.xpose.msra.mxu0 %v1008
    %1010 = vmatprep.subr.mxu0 0.0
    %v1011 = vand.u32 %v820, 4294901760
    %v1012 = vsub.f32 %v820, %v1011
    %v1013 = vand.u32 %v1012, 4294901760
    %v1014 = vsub.f32 %v1012, %v1013
    %v1015 = vand.u32 %v1014, 4294901760
    %1016 = vmatpush1.xpose.msra.mxu0 %v1015
    %1017 = vmatprep.subr.mxu0 0.0
    %v1018 = vand.u32 %v823, 4294901760
    %v1019 = vsub.f32 %v823, %v1018
    %v1020 = vand.u32 %v1019, 4294901760
    %v1021 = vsub.f32 %v1019, %v1020
    %v1022 = vand.u32 %v1021, 4294901760
    %1023 = vmatpush1.xpose.msra.mxu0 %v1022
    %1024 = vmatprep.subr.mxu0 0.0
    %v1025 = vand.u32 %v826, 4294901760
    %v1026 = vsub.f32 %v826, %v1025
    %v1027 = vand.u32 %v1026, 4294901760
    %v1028 = vsub.f32 %v1026, %v1027
    %v1029 = vand.u32 %v1028, 4294901760
    %1030 = vmatpush1.xpose.msra.mxu0 %v1029
    %1031 = vmatprep.subr.mxu0 0.0
    %1032 = vmatpush1.xpose.msra.mxu0 0.0
    %1033 = vmatprep.subr.mxu0 0.0
    %1034 = vmatpush1.xpose.msra.mxu0 0.0
    %1035 = vmatprep.subr.mxu0 0.0
    %1036 = vmatpush1.xpose.msra.mxu0 0.0
    %1037 = vmatprep.subr.mxu0 0.0
    %1038 = vmatpush1.xpose.msra.mxu0 0.0
    %1039 = vmatprep.subr.mxu0 0.0
    %1040 = vmatpush1.xpose.msra.mxu0 0.0
    %1041 = vmatprep.subr.mxu0 0.0
    %1042 = vmatpush1.xpose.msra.mxu0 0.0
    %1043 = vmatprep.subr.mxu0 0.0
    %1044 = vmatpush1.xpose.msra.mxu0 0.0
    %1045 = vmatprep.subr.mxu0 0.0
    %1046 = vmatpush1.xpose.msra.mxu0 0.0
    %1047 = vmatprep.subr.mxu0 0.0
    %1048 = vmatpush1.xpose.msra.mxu0 0.0
    %1049 = vmatprep.subr.mxu0 0.0
    %1050 = vmatpush1.xpose.msra.mxu0 0.0
    %1051 = vmatprep.subr.mxu0 0.0
    %1052 = vmatpush1.xpose.msra.mxu0 0.0
    %1053 = vmatprep.subr.mxu0 0.0
    %1054 = vmatpush1.xpose.msra.mxu0 0.0
    %1055 = vmatprep.subr.mxu0 0.0
    %1056 = vmatpush1.xpose.msra.mxu0 0.0
    %1057 = vmatprep.subr.mxu0 0.0
    %1058 = vmatpush1.xpose.msra.mxu0 0.0
    %1059 = vmatprep.subr.mxu0 0.0
    %1060 = vmatpush1.xpose.msra.mxu0 0.0
    %1061 = vmatprep.subr.mxu0 0.0
    %1062 = vmatpush1.xpose.msra.mxu0 0.0
    %1063 = vmatprep.mubr.f32.mxu0 0.0
    %v1064 = vand.u32 %v778, 4294901760
    %1065 = vmatmul.mubr.f32.gmra.mrb[0].mxu0 %v1064
    %v1066 = vpop.f32.mrb[0].mxu0
    %v1067 = vadd.f32 %v916, %v1066
    %v1068 = vpop.f32.mrb[0].mxu0
    %1069 = vdwg.mxu0
    %1070 = vmatprep.subr.mxu0 0.0
    %v1071 = vand.u32 %v781, 4294901760
    %v1072 = vsub.f32 %v781, %v1071
    %1073 = vmatpush1.xpose.msra.mxu0 %v1072
    %1074 = vmatprep.subr.mxu0 0.0
    %v1075 = vand.u32 %v784, 4294901760
    %v1076 = vsub.f32 %v784, %v1075
    %1077 = vmatpush1.xpose.msra.mxu0 %v1076
    %1078 = vmatprep.subr.mxu0 0.0
    %v1079 = vand.u32 %v787, 4294901760
    %v1080 = vsub.f32 %v787, %v1079
    %1081 = vmatpush1.xpose.msra.mxu0 %v1080
    %1082 = vmatprep.subr.mxu0 0.0
    %v1083 = vand.u32 %v790, 4294901760
    %v1084 = vsub.f32 %v790, %v1083
    %1085 = vmatpush1.xpose.msra.mxu0 %v1084
    %1086 = vmatprep.subr.mxu0 0.0
    %v1087 = vand.u32 %v793, 4294901760
    %v1088 = vsub.f32 %v793, %v1087
    %1089 = vmatpush1.xpose.msra.mxu0 %v1088
    %1090 = vmatprep.subr.mxu0 0.0
    %v1091 = vand.u32 %v796, 4294901760
    %v1092 = vsub.f32 %v796, %v1091
    %1093 = vmatpush1.xpose.msra.mxu0 %v1092
    %1094 = vmatprep.subr.mxu0 0.0
    %v1095 = vand.u32 %v799, 4294901760
    %v1096 = vsub.f32 %v799, %v1095
    %1097 = vmatpush1.xpose.msra.mxu0 %v1096
    %1098 = vmatprep.subr.mxu0 0.0
    %v1099 = vand.u32 %v802, 4294901760
    %v1100 = vsub.f32 %v802, %v1099
    %1101 = vmatpush1.xpose.msra.mxu0 %v1100
    %1102 = vmatprep.subr.mxu0 0.0
    %v1103 = vand.u32 %v805, 4294901760
    %v1104 = vsub.f32 %v805, %v1103
    %1105 = vmatpush1.xpose.msra.mxu0 %v1104
    %1106 = vmatprep.subr.mxu0 0.0
    %v1107 = vand.u32 %v808, 4294901760
    %v1108 = vsub.f32 %v808, %v1107
    %1109 = vmatpush1.xpose.msra.mxu0 %v1108
    %1110 = vmatprep.subr.mxu0 0.0
    %v1111 = vand.u32 %v811, 4294901760
    %v1112 = vsub.f32 %v811, %v1111
    %1113 = vmatpush1.xpose.msra.mxu0 %v1112
    %1114 = vmatprep.subr.mxu0 0.0
    %v1115 = vand.u32 %v814, 4294901760
    %v1116 = vsub.f32 %v814, %v1115
    %1117 = vmatpush1.xpose.msra.mxu0 %v1116
    %1118 = vmatprep.subr.mxu0 0.0
    %v1119 = vand.u32 %v817, 4294901760
    %v1120 = vsub.f32 %v817, %v1119
    %1121 = vmatpush1.xpose.msra.mxu0 %v1120
    %1122 = vmatprep.subr.mxu0 0.0
    %v1123 = vand.u32 %v820, 4294901760
    %v1124 = vsub.f32 %v820, %v1123
    %1125 = vmatpush1.xpose.msra.mxu0 %v1124
    %1126 = vmatprep.subr.mxu0 0.0
    %v1127 = vand.u32 %v823, 4294901760
    %v1128 = vsub.f32 %v823, %v1127
    %1129 = vmatpush1.xpose.msra.mxu0 %v1128
    %1130 = vmatprep.subr.mxu0 0.0
    %v1131 = vand.u32 %v826, 4294901760
    %v1132 = vsub.f32 %v826, %v1131
    %1133 = vmatpush1.xpose.msra.mxu0 %v1132
    %1134 = vmatprep.subr.mxu0 0.0
    %1135 = vmatpush1.xpose.msra.mxu0 0.0
    %1136 = vmatprep.subr.mxu0 0.0
    %1137 = vmatpush1.xpose.msra.mxu0 0.0
    %1138 = vmatprep.subr.mxu0 0.0
    %1139 = vmatpush1.xpose.msra.mxu0 0.0
    %1140 = vmatprep.subr.mxu0 0.0
    %1141 = vmatpush1.xpose.msra.mxu0 0.0
    %1142 = vmatprep.subr.mxu0 0.0
    %1143 = vmatpush1.xpose.msra.mxu0 0.0
    %1144 = vmatprep.subr.mxu0 0.0
    %1145 = vmatpush1.xpose.msra.mxu0 0.0
    %1146 = vmatprep.subr.mxu0 0.0
    %1147 = vmatpush1.xpose.msra.mxu0 0.0
    %1148 = vmatprep.subr.mxu0 0.0
    %1149 = vmatpush1.xpose.msra.mxu0 0.0
    %1150 = vmatprep.subr.mxu0 0.0
    %1151 = vmatpush1.xpose.msra.mxu0 0.0
    %1152 = vmatprep.subr.mxu0 0.0
    %1153 = vmatpush1.xpose.msra.mxu0 0.0
    %1154 = vmatprep.subr.mxu0 0.0
    %1155 = vmatpush1.xpose.msra.mxu0 0.0
    %1156 = vmatprep.subr.mxu0 0.0
    %1157 = vmatpush1.xpose.msra.mxu0 0.0
    %1158 = vmatprep.subr.mxu0 0.0
    %1159 = vmatpush1.xpose.msra.mxu0 0.0
    %1160 = vmatprep.subr.mxu0 0.0
    %1161 = vmatpush1.xpose.msra.mxu0 0.0
    %1162 = vmatprep.subr.mxu0 0.0
    %1163 = vmatpush1.xpose.msra.mxu0 0.0
    %1164 = vmatprep.subr.mxu0 0.0
    %1165 = vmatpush1.xpose.msra.mxu0 0.0
    %1166 = vmatprep.mubr.f32.mxu0 0.0
    %v1167 = vand.u32 %v778, 4294901760
    %v1168 = vsub.f32 %v778, %v1167
    %1169 = vmatmul.mubr.f32.gmra.mrb[0].mxu0 %v1168
    %v1170 = vpop.f32.mrb[0].mxu0
    %v1171 = vadd.f32 %v1067, %v1170
    %v1172 = vpop.f32.mrb[0].mxu0
    %1173 = vdwg.mxu0
    %1174 = vmatprep.subr.mxu0 0.0
    %v1175 = vand.u32 %v781, 4294901760
    %1176 = vmatpush1.xpose.msra.mxu0 %v1175
    %1177 = vmatprep.subr.mxu0 0.0
    %v1178 = vand.u32 %v784, 4294901760
    %1179 = vmatpush1.xpose.msra.mxu0 %v1178
    %1180 = vmatprep.subr.mxu0 0.0
    %v1181 = vand.u32 %v787, 4294901760
    %1182 = vmatpush1.xpose.msra.mxu0 %v1181
    %1183 = vmatprep.subr.mxu0 0.0
    %v1184 = vand.u32 %v790, 4294901760
    %1185 = vmatpush1.xpose.msra.mxu0 %v1184
    %1186 = vmatprep.subr.mxu0 0.0
    %v1187 = vand.u32 %v793, 4294901760
    %1188 = vmatpush1.xpose.msra.mxu0 %v1187
    %1189 = vmatprep.subr.mxu0 0.0
    %v1190 = vand.u32 %v796, 4294901760
    %1191 = vmatpush1.xpose.msra.mxu0 %v1190
    %1192 = vmatprep.subr.mxu0 0.0
    %v1193 = vand.u32 %v799, 4294901760
    %1194 = vmatpush1.xpose.msra.mxu0 %v1193
    %1195 = vmatprep.subr.mxu0 0.0
    %v1196 = vand.u32 %v802, 4294901760
    %1197 = vmatpush1.xpose.msra.mxu0 %v1196
    %1198 = vmatprep.subr.mxu0 0.0
    %v1199 = vand.u32 %v805, 4294901760
    %1200 = vmatpush1.xpose.msra.mxu0 %v1199
    %1201 = vmatprep.subr.mxu0 0.0
    %v1202 = vand.u32 %v808, 4294901760
    %1203 = vmatpush1.xpose.msra.mxu0 %v1202
    %1204 = vmatprep.subr.mxu0 0.0
    %v1205 = vand.u32 %v811, 4294901760
    %1206 = vmatpush1.xpose.msra.mxu0 %v1205
    %1207 = vmatprep.subr.mxu0 0.0
    %v1208 = vand.u32 %v814, 4294901760
    %1209 = vmatpush1.xpose.msra.mxu0 %v1208
    %1210 = vmatprep.subr.mxu0 0.0
    %v1211 = vand.u32 %v817, 4294901760
    %1212 = vmatpush1.xpose.msra.mxu0 %v1211
    %1213 = vmatprep.subr.mxu0 0.0
    %v1214 = vand.u32 %v820, 4294901760
    %1215 = vmatpush1.xpose.msra.mxu0 %v1214
    %1216 = vmatprep.subr.mxu0 0.0
    %v1217 = vand.u32 %v823, 4294901760
    %1218 = vmatpush1.xpose.msra.mxu0 %v1217
    %1219 = vmatprep.subr.mxu0 0.0
    %v1220 = vand.u32 %v826, 4294901760
    %1221 = vmatpush1.xpose.msra.mxu0 %v1220
    %1222 = vmatprep.subr.mxu0 0.0
    %1223 = vmatpush1.xpose.msra.mxu0 0.0
    %1224 = vmatprep.subr.mxu0 0.0
    %1225 = vmatpush1.xpose.msra.mxu0 0.0
    %1226 = vmatprep.subr.mxu0 0.0
    %1227 = vmatpush1.xpose.msra.mxu0 0.0
    %1228 = vmatprep.subr.mxu0 0.0
    %1229 = vmatpush1.xpose.msra.mxu0 0.0
    %1230 = vmatprep.subr.mxu0 0.0
    %1231 = vmatpush1.xpose.msra.mxu0 0.0
    %1232 = vmatprep.subr.mxu0 0.0
    %1233 = vmatpush1.xpose.msra.mxu0 0.0
    %1234 = vmatprep.subr.mxu0 0.0
    %1235 = vmatpush1.xpose.msra.mxu0 0.0
    %1236 = vmatprep.subr.mxu0 0.0
    %1237 = vmatpush1.xpose.msra.mxu0 0.0
    %1238 = vmatprep.subr.mxu0 0.0
    %1239 = vmatpush1.xpose.msra.mxu0 0.0
    %1240 = vmatprep.subr.mxu0 0.0
    %1241 = vmatpush1.xpose.msra.mxu0 0.0
    %1242 = vmatprep.subr.mxu0 0.0
    %1243 = vmatpush1.xpose.msra.mxu0 0.0
    %1244 = vmatprep.subr.mxu0 0.0
    %1245 = vmatpush1.xpose.msra.mxu0 0.0
    %1246 = vmatprep.subr.mxu0 0.0
    %1247 = vmatpush1.xpose.msra.mxu0 0.0
    %1248 = vmatprep.subr.mxu0 0.0
    %1249 = vmatpush1.xpose.msra.mxu0 0.0
    %1250 = vmatprep.subr.mxu0 0.0
    %1251 = vmatpush1.xpose.msra.mxu0 0.0
    %1252 = vmatprep.subr.mxu0 0.0
    %1253 = vmatpush1.xpose.msra.mxu0 0.0
    %1254 = vmatprep.mubr.f32.mxu0 0.0
    %v1255 = vand.u32 %v778, 4294901760
    %v1256 = vsub.f32 %v778, %v1255
    %v1257 = vand.u32 %v1256, 4294901760
    %1258 = vmatmul.mubr.f32.gmra.mrb[0].mxu0 %v1257
    %v1259 = vpop.f32.mrb[0].mxu0
    %v1260 = vadd.f32 %v1171, %v1259
    %v1261 = vpop.f32.mrb[0].mxu0
    %1262 = vdwg.mxu0
    %1263 = vmatprep.subr.mxu0 0.0
    %v1264 = vand.u32 %v781, 4294901760
    %v1265 = vsub.f32 %v781, %v1264
    %v1266 = vand.u32 %v1265, 4294901760
    %1267 = vmatpush1.xpose.msra.mxu0 %v1266
    %1268 = vmatprep.subr.mxu0 0.0
    %v1269 = vand.u32 %v784, 4294901760
    %v1270 = vsub.f32 %v784, %v1269
    %v1271 = vand.u32 %v1270, 4294901760
    %1272 = vmatpush1.xpose.msra.mxu0 %v1271
    %1273 = vmatprep.subr.mxu0 0.0
    %v1274 = vand.u32 %v787, 4294901760
    %v1275 = vsub.f32 %v787, %v1274
    %v1276 = vand.u32 %v1275, 4294901760
    %1277 = vmatpush1.xpose.msra.mxu0 %v1276
    %1278 = vmatprep.subr.mxu0 0.0
    %v1279 = vand.u32 %v790, 4294901760
    %v1280 = vsub.f32 %v790, %v1279
    %v1281 = vand.u32 %v1280, 4294901760
    %1282 = vmatpush1.xpose.msra.mxu0 %v1281
    %1283 = vmatprep.subr.mxu0 0.0
    %v1284 = vand.u32 %v793, 4294901760
    %v1285 = vsub.f32 %v793, %v1284
    %v1286 = vand.u32 %v1285, 4294901760
    %1287 = vmatpush1.xpose.msra.mxu0 %v1286
    %1288 = vmatprep.subr.mxu0 0.0
    %v1289 = vand.u32 %v796, 4294901760
    %v1290 = vsub.f32 %v796, %v1289
    %v1291 = vand.u32 %v1290, 4294901760
    %1292 = vmatpush1.xpose.msra.mxu0 %v1291
    %1293 = vmatprep.subr.mxu0 0.0
    %v1294 = vand.u32 %v799, 4294901760
    %v1295 = vsub.f32 %v799, %v1294
    %v1296 = vand.u32 %v1295, 4294901760
    %1297 = vmatpush1.xpose.msra.mxu0 %v1296
    %1298 = vmatprep.subr.mxu0 0.0
    %v1299 = vand.u32 %v802, 4294901760
    %v1300 = vsub.f32 %v802, %v1299
    %v1301 = vand.u32 %v1300, 4294901760
    %1302 = vmatpush1.xpose.msra.mxu0 %v1301
    %1303 = vmatprep.subr.mxu0 0.0
    %v1304 = vand.u32 %v805, 4294901760
    %v1305 = vsub.f32 %v805, %v1304
    %v1306 = vand.u32 %v1305, 4294901760
    %1307 = vmatpush1.xpose.msra.mxu0 %v1306
    %1308 = vmatprep.subr.mxu0 0.0
    %v1309 = vand.u32 %v808, 4294901760
    %v1310 = vsub.f32 %v808, %v1309
    %v1311 = vand.u32 %v1310, 4294901760
    %1312 = vmatpush1.xpose.msra.mxu0 %v1311
    %1313 = vmatprep.subr.mxu0 0.0
    %v1314 = vand.u32 %v811, 4294901760
    %v1315 = vsub.f32 %v811, %v1314
    %v1316 = vand.u32 %v1315, 4294901760
    %1317 = vmatpush1.xpose.msra.mxu0 %v1316
    %1318 = vmatprep.subr.mxu0 0.0
    %v1319 = vand.u32 %v814, 4294901760
    %v1320 = vsub.f32 %v814, %v1319
    %v1321 = vand.u32 %v1320, 4294901760
    %1322 = vmatpush1.xpose.msra.mxu0 %v1321
    %1323 = vmatprep.subr.mxu0 0.0
    %v1324 = vand.u32 %v817, 4294901760
    %v1325 = vsub.f32 %v817, %v1324
    %v1326 = vand.u32 %v1325, 4294901760
    %1327 = vmatpush1.xpose.msra.mxu0 %v1326
    %1328 = vmatprep.subr.mxu0 0.0
    %v1329 = vand.u32 %v820, 4294901760
    %v1330 = vsub.f32 %v820, %v1329
    %v1331 = vand.u32 %v1330, 4294901760
    %1332 = vmatpush1.xpose.msra.mxu0 %v1331
    %1333 = vmatprep.subr.mxu0 0.0
    %v1334 = vand.u32 %v823, 4294901760
    %v1335 = vsub.f32 %v823, %v1334
    %v1336 = vand.u32 %v1335, 4294901760
    %1337 = vmatpush1.xpose.msra.mxu0 %v1336
    %1338 = vmatprep.subr.mxu0 0.0
    %v1339 = vand.u32 %v826, 4294901760
    %v1340 = vsub.f32 %v826, %v1339
    %v1341 = vand.u32 %v1340, 4294901760
    %1342 = vmatpush1.xpose.msra.mxu0 %v1341
    %1343 = vmatprep.subr.mxu0 0.0
    %1344 = vmatpush1.xpose.msra.mxu0 0.0
    %1345 = vmatprep.subr.mxu0 0.0
    %1346 = vmatpush1.xpose.msra.mxu0 0.0
    %1347 = vmatprep.subr.mxu0 0.0
    %1348 = vmatpush1.xpose.msra.mxu0 0.0
    %1349 = vmatprep.subr.mxu0 0.0
    %1350 = vmatpush1.xpose.msra.mxu0 0.0
    %1351 = vmatprep.subr.mxu0 0.0
    %1352 = vmatpush1.xpose.msra.mxu0 0.0
    %1353 = vmatprep.subr.mxu0 0.0
    %1354 = vmatpush1.xpose.msra.mxu0 0.0
    %1355 = vmatprep.subr.mxu0 0.0
    %1356 = vmatpush1.xpose.msra.mxu0 0.0
    %1357 = vmatprep.subr.mxu0 0.0
    %1358 = vmatpush1.xpose.msra.mxu0 0.0
    %1359 = vmatprep.subr.mxu0 0.0
    %1360 = vmatpush1.xpose.msra.mxu0 0.0
    %1361 = vmatprep.subr.mxu0 0.0
    %1362 = vmatpush1.xpose.msra.mxu0 0.0
    %1363 = vmatprep.subr.mxu0 0.0
    %1364 = vmatpush1.xpose.msra.mxu0 0.0
    %1365 = vmatprep.subr.mxu0 0.0
    %1366 = vmatpush1.xpose.msra.mxu0 0.0
    %1367 = vmatprep.subr.mxu0 0.0
    %1368 = vmatpush1.xpose.msra.mxu0 0.0
    %1369 = vmatprep.subr.mxu0 0.0
    %1370 = vmatpush1.xpose.msra.mxu0 0.0
    %1371 = vmatprep.subr.mxu0 0.0
    %1372 = vmatpush1.xpose.msra.mxu0 0.0
    %1373 = vmatprep.subr.mxu0 0.0
    %1374 = vmatpush1.xpose.msra.mxu0 0.0
    %1375 = vmatprep.mubr.f32.mxu0 0.0
    %v1376 = vand.u32 %v778, 4294901760
    %1377 = vmatmul.mubr.f32.gmra.mrb[0].mxu0 %v1376
    %v1378 = vpop.f32.mrb[0].mxu0
    %v1379 = vadd.f32 %v1260, %v1378
    %v1380 = vpop.f32.mrb[0].mxu0
    %1381 = vdwg.mxu0
    %1382 = vmatprep.subr.mxu0 0.0
    %v1383 = vand.u32 %v781, 4294901760
    %1384 = vmatpush1.xpose.msra.mxu0 %v1383
    %1385 = vmatprep.subr.mxu0 0.0
    %v1386 = vand.u32 %v784, 4294901760
    %1387 = vmatpush1.xpose.msra.mxu0 %v1386
    %1388 = vmatprep.subr.mxu0 0.0
    %v1389 = vand.u32 %v787, 4294901760
    %1390 = vmatpush1.xpose.msra.mxu0 %v1389
    %1391 = vmatprep.subr.mxu0 0.0
    %v1392 = vand.u32 %v790, 4294901760
    %1393 = vmatpush1.xpose.msra.mxu0 %v1392
    %1394 = vmatprep.subr.mxu0 0.0
    %v1395 = vand.u32 %v793, 4294901760
    %1396 = vmatpush1.xpose.msra.mxu0 %v1395
    %1397 = vmatprep.subr.mxu0 0.0
    %v1398 = vand.u32 %v796, 4294901760
    %1399 = vmatpush1.xpose.msra.mxu0 %v1398
    %1400 = vmatprep.subr.mxu0 0.0
    %v1401 = vand.u32 %v799, 4294901760
    %1402 = vmatpush1.xpose.msra.mxu0 %v1401
    %1403 = vmatprep.subr.mxu0 0.0
    %v1404 = vand.u32 %v802, 4294901760
    %1405 = vmatpush1.xpose.msra.mxu0 %v1404
    %1406 = vmatprep.subr.mxu0 0.0
    %v1407 = vand.u32 %v805, 4294901760
    %1408 = vmatpush1.xpose.msra.mxu0 %v1407
    %1409 = vmatprep.subr.mxu0 0.0
    %v1410 = vand.u32 %v808, 4294901760
    %1411 = vmatpush1.xpose.msra.mxu0 %v1410
    %1412 = vmatprep.subr.mxu0 0.0
    %v1413 = vand.u32 %v811, 4294901760
    %1414 = vmatpush1.xpose.msra.mxu0 %v1413
    %1415 = vmatprep.subr.mxu0 0.0
    %v1416 = vand.u32 %v814, 4294901760
    %1417 = vmatpush1.xpose.msra.mxu0 %v1416
    %1418 = vmatprep.subr.mxu0 0.0
    %v1419 = vand.u32 %v817, 4294901760
    %1420 = vmatpush1.xpose.msra.mxu0 %v1419
    %1421 = vmatprep.subr.mxu0 0.0
    %v1422 = vand.u32 %v820, 4294901760
    %1423 = vmatpush1.xpose.msra.mxu0 %v1422
    %1424 = vmatprep.subr.mxu0 0.0
    %v1425 = vand.u32 %v823, 4294901760
    %1426 = vmatpush1.xpose.msra.mxu0 %v1425
    %1427 = vmatprep.subr.mxu0 0.0
    %v1428 = vand.u32 %v826, 4294901760
    %1429 = vmatpush1.xpose.msra.mxu0 %v1428
    %1430 = vmatprep.subr.mxu0 0.0
    %1431 = vmatpush1.xpose.msra.mxu0 0.0
    %1432 = vmatprep.subr.mxu0 0.0
    %1433 = vmatpush1.xpose.msra.mxu0 0.0
    %1434 = vmatprep.subr.mxu0 0.0
    %1435 = vmatpush1.xpose.msra.mxu0 0.0
    %1436 = vmatprep.subr.mxu0 0.0
    %1437 = vmatpush1.xpose.msra.mxu0 0.0
    %1438 = vmatprep.subr.mxu0 0.0
    %1439 = vmatpush1.xpose.msra.mxu0 0.0
    %1440 = vmatprep.subr.mxu0 0.0
    %1441 = vmatpush1.xpose.msra.mxu0 0.0
    %1442 = vmatprep.subr.mxu0 0.0
    %1443 = vmatpush1.xpose.msra.mxu0 0.0
    %1444 = vmatprep.subr.mxu0 0.0
    %1445 = vmatpush1.xpose.msra.mxu0 0.0
    %1446 = vmatprep.subr.mxu0 0.0
    %1447 = vmatpush1.xpose.msra.mxu0 0.0
    %1448 = vmatprep.subr.mxu0 0.0
    %1449 = vmatpush1.xpose.msra.mxu0 0.0
    %1450 = vmatprep.subr.mxu0 0.0
    %1451 = vmatpush1.xpose.msra.mxu0 0.0
    %1452 = vmatprep.subr.mxu0 0.0
    %1453 = vmatpush1.xpose.msra.mxu0 0.0
    %1454 = vmatprep.subr.mxu0 0.0
    %1455 = vmatpush1.xpose.msra.mxu0 0.0
    %1456 = vmatprep.subr.mxu0 0.0
    %1457 = vmatpush1.xpose.msra.mxu0 0.0
    %1458 = vmatprep.subr.mxu0 0.0
    %1459 = vmatpush1.xpose.msra.mxu0 0.0
    %1460 = vmatprep.subr.mxu0 0.0
    %1461 = vmatpush1.xpose.msra.mxu0 0.0
    %1462 = vmatprep.mubr.f32.mxu0 0.0
    %v1463 = vand.u32 %v778, 4294901760
    %1464 = vmatmul.mubr.f32.gmra.mrb[0].mxu0 %v1463
    %v1465 = vpop.f32.mrb[0].mxu0
    %v1466 = vadd.f32 %v1379, %v1465
    %v1467 = vpop.f32.mrb[0].mxu0
    %1468 = vdwg.mxu0
    %v1469 = vmul.f32 %v774, 0.17677669
    %v1470 = vmul.f32 %v1466, 0.17677669
    %v1471 = vlaneseq
    %v1472 = vand.u32 %v1471, 127
    %vm1473 = vcmp.lt.s32.totalorder %v1472, 8
    %v1474 = vsel %vm1473, %v1469, -inf
    %v1475 = vsel %vm1473, %v1470, -inf
    %1476 = vmax.xlane.f32.xlu0 %v1474
    %v1477 = vpop.xlane.xlu0 %1476
    %1478 = vmax.xlane.f32.xlu0 %v1475
    %v1479 = vpop.xlane.xlu0 %1478
    %v1480 = vsub.f32 %v1474, %v1477
    %v1481 = vsub.f32 %v1475, %v1479
    %v1482 = vmul.f32 %v1480, 1.442695
    %v1483 = vpow.pop %v1482
    %v1484 = vmul.f32 %v1481, 1.442695
    %v1485 = vpow.pop %v1484
    %1486 = vadd.xlane.f32.xlu0 %v1483
    %v1487 = vpop.xlane.xlu0 %1486
    %1488 = vadd.xlane.f32.xlu0 %v1485
    %v1489 = vpop.xlane.xlu0 %1488
    %v1490 = vrcp.pop %v1487
    %v1491 = vrcp.pop %v1489
    %v1492 = vmul.f32 %v1483, %v1490
    %v1493 = vmul.f32 %v1485, %v1491
    %1494 = vst [vmem:[#allocation3] sm:$0xff] %v1492
    %1495 = vst [vmem:[#allocation3 + $0x8] sm:$0xff] %v1493
    // Predicated region
    $region48: #{tpu_custom_call.1} parent=1 // pred_check
      _
    $region49: #{tpu_custom_call.1} parent=1 // pred_check_branch
      %1497 = sbr.rel (0) target = $region51
    $region50: #{tpu_custom_call.1} parent=1 // pred_region
      %s1499 = ssub.s32 256, 256
      %1500 = vsyncadd [#allocation4], %s1499
      %s1501 = sshll.u32 [#allocation3], 4
      %s1502 = int_to_ptr.vmem [resolvable:$true] %s1501
      %1507 = dma.vmem_to_hbm [thread:$0]  %s1502, 256, %s2, [#allocation4], 128, 128, 8
    $region51: #{tpu_custom_call.1} parent=1 // pred_fallthru
      _
    // Predicated region
    $region52: #{tpu_custom_call.1} parent=1 // pred_check
      _
    $region53: #{tpu_custom_call.1} parent=1 // pred_check_branch
      %1509 = sbr.rel (0) target = $region55
    $region54: #{tpu_custom_call.1} parent=1 // pred_region
      %1510 = dma.done [#allocation4], 256
    $region55: #{tpu_custom_call.1} parent=1 // pred_fallthru
      _
    %1511 = vsyncpa [#allocation4], 1

</llo_original>
